<compile_context>
chip_gen: v7x
topology: tpu7x:2x2x1
jax: 0.10.0
libtpu: 0.0.40
codegen_flags: <defaults>
</compile_context>

<pallas_src>
import functools

import jax
import jax.numpy as jnp
from jax import lax
from jax.experimental import pallas as pl
from jax.experimental.pallas import tpu as pltpu


def _begin_block_kernel(x_ref, w0_ref, a0_ref, w1_ref, b1_ref, a1_ref,
                        w2_ref, b2_ref, a2_ref, o_ref,
                        buf0, buf1, buf2, slab0, slab1, slab2,
                        *, H, W, B, PAD):
    """One grid step processes B images.

    x_ref  : (B, Cin, H*W)          NCHW input, spatial flattened (lane-dense)
    w*_ref : (cout, 9*cin)          conv weights, K index = tap*cin + ci
    b*_ref : (cout, 1)              conv bias columns (VMEM)
    a*_ref : (1,)                   PReLU shared alpha (SMEM)
    o_ref  : (B, C0, H*W)           channel-major output block (lane-dense)
    buf*   : (cin, 2*PAD + H*W)     per-image staging buffer; [PAD, PAD+HW) is
                                    the image, the two PAD-lane guard bands are
                                    zero so row-overflow tap reads are 0.
    slab*  : (9*cin, B*H*W)         im2col slabs (contiguous, lane-dense)
    """
    HW = H * W
    P = 2 * PAD + HW
    f32 = jnp.float32

    # Column-validity masks (row validity comes from the zero guard bands).
    wcol = lax.broadcasted_iota(jnp.int32, (1, HW), 1) % W
    mask_l = wcol != 0          # valid lanes for taps that look one column left
    mask_r = wcol != (W - 1)    # valid lanes for taps that look one column right

    def zero_guards(buf):
        c = buf.shape[0]
        buf[:, 0:PAD] = jnp.zeros((c, PAD), f32)
        buf[:, PAD + HW:P] = jnp.zeros((c, PAD), f32)

    zero_guards(buf0)
    zero_guards(buf1)
    zero_guards(buf2)

    def im2col_taps(buf, slab, b):
        # Write the 9 shifted copies of image b into the slab (each exactly
        # once, lane-dense stores at static offsets).
        cin = buf.shape[0]
        for dh in range(3):
            for dw in range(3):
                t = dh * 3 + dw
                off = PAD + (dh - 1) * W + (dw - 1)   # static lane offset
                piece = buf[:, off:off + HW]
                if dw == 0:
                    piece = jnp.where(mask_l, piece, 0.0)
                elif dw == 2:
                    piece = jnp.where(mask_r, piece, 0.0)
                slab[t * cin:(t + 1) * cin, b * HW:(b + 1) * HW] = piece

    def prelu(y, alpha):
        return jnp.where(y >= 0, y, alpha * y)

    # ---- conv0: Cin -> C0, no bias ---------------------------------------
    for b in range(B):
        buf0[:, PAD:PAD + HW] = x_ref[b].astype(f32)
        im2col_taps(buf0, slab0, b)
    y0 = prelu(jnp.dot(w0_ref[...], slab0[...],
                       preferred_element_type=f32), a0_ref[0])       # (C0, B*HW)

    # ---- conv1: C0 -> 2*C0, bias ------------------------------------------
    for b in range(B):
        buf1[:, PAD:PAD + HW] = y0[:, b * HW:(b + 1) * HW]
        im2col_taps(buf1, slab1, b)
    y1 = prelu(jnp.dot(w1_ref[...], slab1[...],
                       preferred_element_type=f32) + b1_ref[...],
               a1_ref[0])                                            # (2C0, B*HW)

    # ---- conv2: 2*C0 -> C0, bias ------------------------------------------
    for b in range(B):
        buf2[:, PAD:PAD + HW] = y1[:, b * HW:(b + 1) * HW]
        im2col_taps(buf2, slab2, b)
    y2 = prelu(jnp.dot(w2_ref[...], slab2[...],
                       preferred_element_type=f32) + b2_ref[...],
               a2_ref[0])                                            # (C0, B*HW)

    # Lane-dense channel-major output stores (one per image in the block).
    for b in range(B):
        o_ref[b] = y2[:, b * HW:(b + 1) * HW].astype(o_ref.dtype)


@functools.partial(jax.jit, static_argnames=("images_per_step",))
def begin_block_forward(x_nchw, w0, a0, w1, b1, a1, w2, b2, a2,
                        images_per_step=None):
    """x_nchw: (N, Cin, H, W).  Conv weights are HWIO (3, 3, cin, cout)."""
    N, Cin, H, W = x_nchw.shape
    C0 = w0.shape[3]
    HW = H * W

    # Images per grid step: amortise per-step overhead but keep >= 2 grid
    # steps so v7x's two TensorCores both get work ("parallel" batch axis).
    if images_per_step is None:
        images_per_step = max(1, min(N // 2, 8))
    B = int(max(1, min(images_per_step, N)))
    G = -(-N // B)                 # grid steps
    Np = G * B                     # batch padded to a multiple of B

    # Free reshape (no transpose, no spatial pad): NCHW -> (N, Cin, H*W).
    x = x_nchw.astype(jnp.float32).reshape(N, Cin, HW)
    if Np != N:
        x = jnp.pad(x, ((0, Np - N), (0, 0), (0, 0)))   # batch tail, discarded

    # Lane guard band width: >= W+1 and a multiple of 128 so the staging store
    # and guard zero-stores are lane-aligned (only the 9 tap reads are shifted).
    PAD = ((W + 1 + 127) // 128) * 128

    # Weight prep (tiny, one-time): HWIO -> (cout, 9*cin) with K = tap*cin+ci.
    # For v6e/v7x these could be cast to bf16 (MXU native) once shapes grow.
    w0f = w0.astype(jnp.float32).reshape(9 * Cin, C0).T
    w1f = w1.astype(jnp.float32).reshape(9 * C0, 2 * C0).T
    w2f = w2.astype(jnp.float32).reshape(9 * 2 * C0, C0).T
    b1c = b1.astype(jnp.float32).reshape(2 * C0, 1)
    b2c = b2.astype(jnp.float32).reshape(C0, 1)
    a0f = a0.astype(jnp.float32).reshape(1)
    a1f = a1.astype(jnp.float32).reshape(1)
    a2f = a2.astype(jnp.float32).reshape(1)

    kernel = functools.partial(_begin_block_kernel, H=H, W=W, B=B, PAD=PAD)

    out = pl.pallas_call(
        kernel,
        out_shape=jax.ShapeDtypeStruct((Np, C0, HW), jnp.float32),
        grid=(G,),
        in_specs=[
            pl.BlockSpec((B, Cin, HW), lambda n: (n, 0, 0)),
            pl.BlockSpec((C0, 9 * Cin), lambda n: (0, 0)),
            pl.BlockSpec(memory_space=pltpu.MemorySpace.SMEM),      # a0 (1,)
            pl.BlockSpec((2 * C0, 9 * C0), lambda n: (0, 0)),
            pl.BlockSpec((2 * C0, 1), lambda n: (0, 0)),
            pl.BlockSpec(memory_space=pltpu.MemorySpace.SMEM),      # a1 (1,)
            pl.BlockSpec((C0, 9 * 2 * C0), lambda n: (0, 0)),
            pl.BlockSpec((C0, 1), lambda n: (0, 0)),
            pl.BlockSpec(memory_space=pltpu.MemorySpace.SMEM),      # a2 (1,)
        ],
        out_specs=pl.BlockSpec((B, C0, HW), lambda n: (n, 0, 0)),
        scratch_shapes=[
            pltpu.VMEM((Cin, 2 * PAD + HW), jnp.float32),        # buf0
            pltpu.VMEM((C0, 2 * PAD + HW), jnp.float32),         # buf1
            pltpu.VMEM((2 * C0, 2 * PAD + HW), jnp.float32),     # buf2
            pltpu.VMEM((9 * Cin, B * HW), jnp.float32),          # slab0
            pltpu.VMEM((9 * C0, B * HW), jnp.float32),           # slab1
            pltpu.VMEM((9 * 2 * C0, B * HW), jnp.float32),       # slab2
        ],
        compiler_params=pltpu.CompilerParams(
            dimension_semantics=("parallel",)),
    )(x, w0f, a0f, w1f, b1c, a1f, w2f, b2c, a2f)

    # Drop batch padding; free reshape back to PyTorch NCHW (no transpose).
    return out[:N].reshape(N, C0, H, W)


def _ref_forward(x_nchw, w0, a0, w1, b1, a1, w2, b2, a2):
    """Pure-JAX reference (NCHW convs) for correctness checking."""
    def conv(x, w, b=None):
        y = lax.conv_general_dilated(
            x, w, window_strides=(1, 1), padding='SAME',
            dimension_numbers=('NCHW', 'HWIO', 'NCHW'),
            precision=lax.Precision.HIGHEST)
        if b is not None:
            y = y + b.reshape(1, -1, 1, 1)
        return y

    def prelu(y, a):
        return jnp.where(y >= 0, y, a[0] * y)

    y = prelu(conv(x_nchw, w0), a0)
    y = prelu(conv(y, w1, b1), a1)
    y = prelu(conv(y, w2, b2), a2)
    return y


if __name__ == "__main__":
    key = jax.random.PRNGKey(0)
    N, Cin, H, W = 2, 4, 16, 16
    C0 = 8  # out_channle

    ks = jax.random.split(key, 6)
    x = jax.random.normal(ks[0], (N, Cin, H, W), jnp.float32)
    # Synthetic parameters (HWIO layout, equivalent to nn.Conv2d weights).
    w0 = jax.random.normal(ks[1], (3, 3, Cin, C0), jnp.float32) * 0.1
    w1 = jax.random.normal(ks[2], (3, 3, C0, 2 * C0), jnp.float32) * 0.1
    b1 = jax.random.normal(ks[3], (2 * C0,), jnp.float32) * 0.1
    w2 = jax.random.normal(ks[4], (3, 3, 2 * C0, C0), jnp.float32) * 0.1
    b2 = jax.random.normal(ks[5], (C0,), jnp.float32) * 0.1
    # PReLU(num_parameters=1, init=0.2) for each ConvBlock.
    a0 = jnp.array([0.2], jnp.float32)
    a1 = jnp.array([0.2], jnp.float32)
    a2 = jnp.array([0.2], jnp.float32)

    out = begin_block_forward(x, w0, a0, w1, b1, a1, w2, b2, a2)
    out = jax.block_until_ready(out)

    ref = _ref_forward(x, w0, a0, w1, b1, a1, w2, b2, a2)
    assert out.shape == (N, C0, H, W), out.shape
    assert jnp.allclose(out, ref, atol=1e-3, rtol=1e-3), float(
        jnp.max(jnp.abs(out - ref)))
    print("KERNEL_OK")
</pallas_src>

<mosaic_0001>
module attributes {stable_mosaic.version = 11 : i64} {
  func.func @_begin_block_kernel(%arg0: i32, %arg1: memref<1x4x256xf32, #tpu.memory_space<vmem>>, %arg2: memref<8x36xf32, #tpu.memory_space<vmem>>, %arg3: memref<1xf32, #tpu.memory_space<smem>>, %arg4: memref<16x72xf32, #tpu.memory_space<vmem>>, %arg5: memref<16x1xf32, #tpu.memory_space<vmem>>, %arg6: memref<1xf32, #tpu.memory_space<smem>>, %arg7: memref<8x144xf32, #tpu.memory_space<vmem>>, %arg8: memref<8x1xf32, #tpu.memory_space<vmem>>, %arg9: memref<1xf32, #tpu.memory_space<smem>>, %arg10: memref<1x8x256xf32, #tpu.memory_space<vmem>>, %arg11: memref<4x512xf32, #tpu.memory_space<vmem>>, %arg12: memref<8x512xf32, #tpu.memory_space<vmem>>, %arg13: memref<16x512xf32, #tpu.memory_space<vmem>>, %arg14: memref<36x256xf32, #tpu.memory_space<vmem>>, %arg15: memref<72x256xf32, #tpu.memory_space<vmem>>, %arg16: memref<144x256xf32, #tpu.memory_space<vmem>>) attributes {dimension_semantics = [#tpu.dimension_semantics<parallel>], iteration_bounds = array<i64: 2>, scalar_prefetch = 0 : i64, scratch_operands = 6 : i64, tpu.core_type = #tpu.core_type<tc>, window_params = [{transform_indices = @transform_0, window_bounds = array<i64: 1, 4, 256>}, {pipeline_mode = #tpu.pipeline_mode<synchronous>, transform_indices = @transform_1, window_bounds = array<i64: 8, 36>}, {transform_indices = @transform_2, window_bounds = array<i64: 1>}, {pipeline_mode = #tpu.pipeline_mode<synchronous>, transform_indices = @transform_3, window_bounds = array<i64: 16, 72>}, {pipeline_mode = #tpu.pipeline_mode<synchronous>, transform_indices = @transform_4, window_bounds = array<i64: 16, 1>}, {transform_indices = @transform_5, window_bounds = array<i64: 1>}, {pipeline_mode = #tpu.pipeline_mode<synchronous>, transform_indices = @transform_6, window_bounds = array<i64: 8, 144>}, {pipeline_mode = #tpu.pipeline_mode<synchronous>, transform_indices = @transform_7, window_bounds = array<i64: 8, 1>}, {transform_indices = @transform_8, window_bounds = array<i64: 1>}, {transform_indices = @transform_9, window_bounds = array<i64: 1, 8, 256>}]} {
    %0 = tpu.iota {dimensions = array<i32: 1>} : vector<1x256xi32>
    %c16_i32 = arith.constant 16 : i32
    %c0_i32 = arith.constant 0 : i32
    %1 = arith.cmpi eq, %c16_i32, %c0_i32 : i32
    %c1_i32 = arith.constant 1 : i32
    %2 = arith.select %1, %c1_i32, %c16_i32 : i32
    %3 = vector.broadcast %2 : i32 to vector<1x256xi32>
    %4 = arith.remsi %0, %3 : vector<1x256xi32>
    %c0_i32_0 = arith.constant 0 : i32
    %5 = vector.broadcast %c0_i32_0 : i32 to vector<1x256xi32>
    %6 = arith.cmpi ne, %4, %5 : vector<1x256xi32>
    %c0_i32_1 = arith.constant 0 : i32
    %7 = vector.broadcast %c0_i32_1 : i32 to vector<1x256xi32>
    %8 = arith.cmpi slt, %4, %7 : vector<1x256xi32>
    %c0_i32_2 = arith.constant 0 : i32
    %9 = arith.cmpi slt, %2, %c0_i32_2 : i32
    %10 = vector.broadcast %9 : i1 to vector<1x256xi1>
    %11 = vector.broadcast %10 : vector<1x256xi1> to vector<1x256xi1>
    %12 = arith.xori %8, %11 : vector<1x256xi1>
    %13 = arith.andi %12, %6 : vector<1x256xi1>
    %14 = vector.broadcast %2 : i32 to vector<1x256xi32>
    %15 = arith.addi %4, %14 : vector<1x256xi32>
    %16 = arith.select %13, %15, %4 : vector<1x256xi1>, vector<1x256xi32>
    %c0_i32_3 = arith.constant 0 : i32
    %17 = vector.broadcast %c0_i32_3 : i32 to vector<1x256xi32>
    %18 = arith.cmpi ne, %16, %17 : vector<1x256xi32>
    %c15_i32 = arith.constant 15 : i32
    %19 = vector.broadcast %c15_i32 : i32 to vector<1x256xi32>
    %20 = arith.cmpi ne, %16, %19 : vector<1x256xi32>
    %cst = arith.constant 0.000000e+00 : f32
    %21 = vector.broadcast %cst : f32 to vector<4x128xf32>
    %c0 = arith.constant 0 : index
    %c0_4 = arith.constant 0 : index
    %22 = vector.load %arg11[%c0, %c0_4] : memref<4x512xf32, #tpu.memory_space<vmem>>, vector<4x128xf32>
    tpu.vector_store %arg11[%c0, %c0_4], %21 {strides = array<i32>} : memref<4x512xf32, #tpu.memory_space<vmem>>, vector<4x128xf32>,
    %cst_5 = arith.constant 0.000000e+00 : f32
    %23 = vector.broadcast %cst_5 : f32 to vector<4x128xf32>
    %c0_6 = arith.constant 0 : index
    %c384 = arith.constant 384 : index
    %24 = vector.load %arg11[%c0_6, %c384] : memref<4x512xf32, #tpu.memory_space<vmem>>, vector<4x128xf32>
    tpu.vector_store %arg11[%c0_6, %c384], %23 {strides = array<i32>} : memref<4x512xf32, #tpu.memory_space<vmem>>, vector<4x128xf32>,
    %cst_7 = arith.constant 0.000000e+00 : f32
    %25 = vector.broadcast %cst_7 : f32 to vector<8x128xf32>
    %c0_8 = arith.constant 0 : index
    %c0_9 = arith.constant 0 : index
    %26 = vector.load %arg12[%c0_8, %c0_9] : memref<8x512xf32, #tpu.memory_space<vmem>>, vector<8x128xf32>
    tpu.vector_store %arg12[%c0_8, %c0_9], %25 {strides = array<i32>} : memref<8x512xf32, #tpu.memory_space<vmem>>, vector<8x128xf32>,
    %cst_10 = arith.constant 0.000000e+00 : f32
    %27 = vector.broadcast %cst_10 : f32 to vector<8x128xf32>
    %c0_11 = arith.constant 0 : index
    %c384_12 = arith.constant 384 : index
    %28 = vector.load %arg12[%c0_11, %c384_12] : memref<8x512xf32, #tpu.memory_space<vmem>>, vector<8x128xf32>
    tpu.vector_store %arg12[%c0_11, %c384_12], %27 {strides = array<i32>} : memref<8x512xf32, #tpu.memory_space<vmem>>, vector<8x128xf32>,
    %cst_13 = arith.constant 0.000000e+00 : f32
    %29 = vector.broadcast %cst_13 : f32 to vector<16x128xf32>
    %c0_14 = arith.constant 0 : index
    %c0_15 = arith.constant 0 : index
    %30 = vector.load %arg13[%c0_14, %c0_15] : memref<16x512xf32, #tpu.memory_space<vmem>>, vector<16x128xf32>
    tpu.vector_store %arg13[%c0_14, %c0_15], %29 {strides = array<i32>} : memref<16x512xf32, #tpu.memory_space<vmem>>, vector<16x128xf32>,
    %cst_16 = arith.constant 0.000000e+00 : f32
    %31 = vector.broadcast %cst_16 : f32 to vector<16x128xf32>
    %c0_17 = arith.constant 0 : index
    %c384_18 = arith.constant 384 : index
    %32 = vector.load %arg13[%c0_17, %c384_18] : memref<16x512xf32, #tpu.memory_space<vmem>>, vector<16x128xf32>
    tpu.vector_store %arg13[%c0_17, %c384_18], %31 {strides = array<i32>} : memref<16x512xf32, #tpu.memory_space<vmem>>, vector<16x128xf32>,
    %c0_19 = arith.constant 0 : index
    %c0_20 = arith.constant 0 : index
    %c0_21 = arith.constant 0 : index
    %33 = vector.load %arg1[%c0_19, %c0_20, %c0_21] : memref<1x4x256xf32, #tpu.memory_space<vmem>>, vector<1x4x256xf32>
    %34 = vector.shape_cast %33 : vector<1x4x256xf32> to vector<4x256xf32>
    %c0_22 = arith.constant 0 : index
    %c128 = arith.constant 128 : index
    %35 = vector.load %arg11[%c0_22, %c128] : memref<4x512xf32, #tpu.memory_space<vmem>>, vector<4x256xf32>
    tpu.vector_store %arg11[%c0_22, %c128], %34 {strides = array<i32>} : memref<4x512xf32, #tpu.memory_space<vmem>>, vector<4x256xf32>,
    %c0_23 = arith.constant 0 : index
    %c111 = arith.constant 111 : index
    %36 = vector.load %arg11[%c0_23, %c111] : memref<4x512xf32, #tpu.memory_space<vmem>>, vector<4x256xf32>
    %cst_24 = arith.constant 0.000000e+00 : f32
    %37 = vector.shape_cast %18 : vector<1x256xi1> to vector<1x256xi1>
    %38 = vector.broadcast %37 : vector<1x256xi1> to vector<4x256xi1>
    %39 = vector.broadcast %cst_24 : f32 to vector<4x256xf32>
    %40 = arith.select %38, %36, %39 : vector<4x256xi1>, vector<4x256xf32>
    %c0_25 = arith.constant 0 : index
    %c0_26 = arith.constant 0 : index
    %41 = vector.load %arg14[%c0_25, %c0_26] : memref<36x256xf32, #tpu.memory_space<vmem>>, vector<4x256xf32>
    tpu.vector_store %arg14[%c0_25, %c0_26], %40 {strides = array<i32>} : memref<36x256xf32, #tpu.memory_space<vmem>>, vector<4x256xf32>,
    %c0_27 = arith.constant 0 : index
    %c112 = arith.constant 112 : index
    %42 = vector.load %arg11[%c0_27, %c112] : memref<4x512xf32, #tpu.memory_space<vmem>>, vector<4x256xf32>
    %c4 = arith.constant 4 : index
    %c0_28 = arith.constant 0 : index
    %43 = vector.load %arg14[%c4, %c0_28] : memref<36x256xf32, #tpu.memory_space<vmem>>, vector<4x256xf32>
    tpu.vector_store %arg14[%c4, %c0_28], %42 {strides = array<i32>} : memref<36x256xf32, #tpu.memory_space<vmem>>, vector<4x256xf32>,
    %c0_29 = arith.constant 0 : index
    %c113 = arith.constant 113 : index
    %44 = vector.load %arg11[%c0_29, %c113] : memref<4x512xf32, #tpu.memory_space<vmem>>, vector<4x256xf32>
    %cst_30 = arith.constant 0.000000e+00 : f32
    %45 = vector.shape_cast %20 : vector<1x256xi1> to vector<1x256xi1>
    %46 = vector.broadcast %45 : vector<1x256xi1> to vector<4x256xi1>
    %47 = vector.broadcast %cst_30 : f32 to vector<4x256xf32>
    %48 = arith.select %46, %44, %47 : vector<4x256xi1>, vector<4x256xf32>
    %c8 = arith.constant 8 : index
    %c0_31 = arith.constant 0 : index
    %49 = vector.load %arg14[%c8, %c0_31] : memref<36x256xf32, #tpu.memory_space<vmem>>, vector<4x256xf32>
    tpu.vector_store %arg14[%c8, %c0_31], %48 {strides = array<i32>} : memref<36x256xf32, #tpu.memory_space<vmem>>, vector<4x256xf32>,
    %c0_32 = arith.constant 0 : index
    %c127 = arith.constant 127 : index
    %50 = vector.load %arg11[%c0_32, %c127] : memref<4x512xf32, #tpu.memory_space<vmem>>, vector<4x256xf32>
    %cst_33 = arith.constant 0.000000e+00 : f32
    %51 = vector.shape_cast %18 : vector<1x256xi1> to vector<1x256xi1>
    %52 = vector.broadcast %51 : vector<1x256xi1> to vector<4x256xi1>
    %53 = vector.broadcast %cst_33 : f32 to vector<4x256xf32>
    %54 = arith.select %52, %50, %53 : vector<4x256xi1>, vector<4x256xf32>
    %c12 = arith.constant 12 : index
    %c0_34 = arith.constant 0 : index
    %55 = vector.load %arg14[%c12, %c0_34] : memref<36x256xf32, #tpu.memory_space<vmem>>, vector<4x256xf32>
    tpu.vector_store %arg14[%c12, %c0_34], %54 {strides = array<i32>} : memref<36x256xf32, #tpu.memory_space<vmem>>, vector<4x256xf32>,
    %c0_35 = arith.constant 0 : index
    %c128_36 = arith.constant 128 : index
    %56 = vector.load %arg11[%c0_35, %c128_36] : memref<4x512xf32, #tpu.memory_space<vmem>>, vector<4x256xf32>
    %c16 = arith.constant 16 : index
    %c0_37 = arith.constant 0 : index
    %57 = vector.load %arg14[%c16, %c0_37] : memref<36x256xf32, #tpu.memory_space<vmem>>, vector<4x256xf32>
    tpu.vector_store %arg14[%c16, %c0_37], %56 {strides = array<i32>} : memref<36x256xf32, #tpu.memory_space<vmem>>, vector<4x256xf32>,
    %c0_38 = arith.constant 0 : index
    %c129 = arith.constant 129 : index
    %58 = vector.load %arg11[%c0_38, %c129] : memref<4x512xf32, #tpu.memory_space<vmem>>, vector<4x256xf32>
    %cst_39 = arith.constant 0.000000e+00 : f32
    %59 = vector.shape_cast %20 : vector<1x256xi1> to vector<1x256xi1>
    %60 = vector.broadcast %59 : vector<1x256xi1> to vector<4x256xi1>
    %61 = vector.broadcast %cst_39 : f32 to vector<4x256xf32>
    %62 = arith.select %60, %58, %61 : vector<4x256xi1>, vector<4x256xf32>
    %c20 = arith.constant 20 : index
    %c0_40 = arith.constant 0 : index
    %63 = vector.load %arg14[%c20, %c0_40] : memref<36x256xf32, #tpu.memory_space<vmem>>, vector<4x256xf32>
    tpu.vector_store %arg14[%c20, %c0_40], %62 {strides = array<i32>} : memref<36x256xf32, #tpu.memory_space<vmem>>, vector<4x256xf32>,
    %c0_41 = arith.constant 0 : index
    %c143 = arith.constant 143 : index
    %64 = vector.load %arg11[%c0_41, %c143] : memref<4x512xf32, #tpu.memory_space<vmem>>, vector<4x256xf32>
    %cst_42 = arith.constant 0.000000e+00 : f32
    %65 = vector.shape_cast %18 : vector<1x256xi1> to vector<1x256xi1>
    %66 = vector.broadcast %65 : vector<1x256xi1> to vector<4x256xi1>
    %67 = vector.broadcast %cst_42 : f32 to vector<4x256xf32>
    %68 = arith.select %66, %64, %67 : vector<4x256xi1>, vector<4x256xf32>
    %c24 = arith.constant 24 : index
    %c0_43 = arith.constant 0 : index
    %69 = vector.load %arg14[%c24, %c0_43] : memref<36x256xf32, #tpu.memory_space<vmem>>, vector<4x256xf32>
    tpu.vector_store %arg14[%c24, %c0_43], %68 {strides = array<i32>} : memref<36x256xf32, #tpu.memory_space<vmem>>, vector<4x256xf32>,
    %c0_44 = arith.constant 0 : index
    %c144 = arith.constant 144 : index
    %70 = vector.load %arg11[%c0_44, %c144] : memref<4x512xf32, #tpu.memory_space<vmem>>, vector<4x256xf32>
    %c28 = arith.constant 28 : index
    %c0_45 = arith.constant 0 : index
    %71 = vector.load %arg14[%c28, %c0_45] : memref<36x256xf32, #tpu.memory_space<vmem>>, vector<4x256xf32>
    tpu.vector_store %arg14[%c28, %c0_45], %70 {strides = array<i32>} : memref<36x256xf32, #tpu.memory_space<vmem>>, vector<4x256xf32>,
    %c0_46 = arith.constant 0 : index
    %c145 = arith.constant 145 : index
    %72 = vector.load %arg11[%c0_46, %c145] : memref<4x512xf32, #tpu.memory_space<vmem>>, vector<4x256xf32>
    %cst_47 = arith.constant 0.000000e+00 : f32
    %73 = vector.shape_cast %20 : vector<1x256xi1> to vector<1x256xi1>
    %74 = vector.broadcast %73 : vector<1x256xi1> to vector<4x256xi1>
    %75 = vector.broadcast %cst_47 : f32 to vector<4x256xf32>
    %76 = arith.select %74, %72, %75 : vector<4x256xi1>, vector<4x256xf32>
    %c32 = arith.constant 32 : index
    %c0_48 = arith.constant 0 : index
    %77 = vector.load %arg14[%c32, %c0_48] : memref<36x256xf32, #tpu.memory_space<vmem>>, vector<4x256xf32>
    tpu.vector_store %arg14[%c32, %c0_48], %76 {strides = array<i32>} : memref<36x256xf32, #tpu.memory_space<vmem>>, vector<4x256xf32>,
    %c0_49 = arith.constant 0 : index
    %c0_50 = arith.constant 0 : index
    %78 = vector.load %arg2[%c0_49, %c0_50] : memref<8x36xf32, #tpu.memory_space<vmem>>, vector<8x36xf32>
    %c0_51 = arith.constant 0 : index
    %c0_52 = arith.constant 0 : index
    %79 = vector.load %arg14[%c0_51, %c0_52] : memref<36x256xf32, #tpu.memory_space<vmem>>, vector<36x256xf32>
    %cst_53 = arith.constant dense<0.000000e+00> : vector<8x256xf32>
    %80 = tpu.matmul %78, %79, %cst_53 {dimension_numbers = #tpu.dot_dimension_numbers<[1], [0], [0], [1], [0, 0, 1, 1], [], []>} : vector<8x36xf32>, vector<36x256xf32>, vector<8x256xf32> -> vector<8x256xf32>
    %c0_54 = arith.constant 0 : index
    %81 = memref.load %arg3[%c0_54] : memref<1xf32, #tpu.memory_space<smem>>
    %cst_55 = arith.constant 0.000000e+00 : f32
    %82 = vector.broadcast %cst_55 : f32 to vector<8x256xf32>
    %83 = arith.cmpf oge, %80, %82 : vector<8x256xf32>
    %84 = vector.broadcast %81 : f32 to vector<8x256xf32>
    %85 = arith.mulf %84, %80 : vector<8x256xf32>
    %86 = arith.select %83, %80, %85 : vector<8x256xi1>, vector<8x256xf32>
    %c0_56 = arith.constant 0 : index
    %c128_57 = arith.constant 128 : index
    %87 = vector.load %arg12[%c0_56, %c128_57] : memref<8x512xf32, #tpu.memory_space<vmem>>, vector<8x256xf32>
    tpu.vector_store %arg12[%c0_56, %c128_57], %86 {strides = array<i32>} : memref<8x512xf32, #tpu.memory_space<vmem>>, vector<8x256xf32>,
    %c0_58 = arith.constant 0 : index
    %c111_59 = arith.constant 111 : index
    %88 = vector.load %arg12[%c0_58, %c111_59] : memref<8x512xf32, #tpu.memory_space<vmem>>, vector<8x256xf32>
    %cst_60 = arith.constant 0.000000e+00 : f32
    %89 = vector.shape_cast %18 : vector<1x256xi1> to vector<1x256xi1>
    %90 = vector.broadcast %89 : vector<1x256xi1> to vector<8x256xi1>
    %91 = vector.broadcast %cst_60 : f32 to vector<8x256xf32>
    %92 = arith.select %90, %88, %91 : vector<8x256xi1>, vector<8x256xf32>
    %c0_61 = arith.constant 0 : index
    %c0_62 = arith.constant 0 : index
    %93 = vector.load %arg15[%c0_61, %c0_62] : memref<72x256xf32, #tpu.memory_space<vmem>>, vector<8x256xf32>
    tpu.vector_store %arg15[%c0_61, %c0_62], %92 {strides = array<i32>} : memref<72x256xf32, #tpu.memory_space<vmem>>, vector<8x256xf32>,
    %c0_63 = arith.constant 0 : index
    %c112_64 = arith.constant 112 : index
    %94 = vector.load %arg12[%c0_63, %c112_64] : memref<8x512xf32, #tpu.memory_space<vmem>>, vector<8x256xf32>
    %c8_65 = arith.constant 8 : index
    %c0_66 = arith.constant 0 : index
    %95 = vector.load %arg15[%c8_65, %c0_66] : memref<72x256xf32, #tpu.memory_space<vmem>>, vector<8x256xf32>
    tpu.vector_store %arg15[%c8_65, %c0_66], %94 {strides = array<i32>} : memref<72x256xf32, #tpu.memory_space<vmem>>, vector<8x256xf32>,
    %c0_67 = arith.constant 0 : index
    %c113_68 = arith.constant 113 : index
    %96 = vector.load %arg12[%c0_67, %c113_68] : memref<8x512xf32, #tpu.memory_space<vmem>>, vector<8x256xf32>
    %cst_69 = arith.constant 0.000000e+00 : f32
    %97 = vector.shape_cast %20 : vector<1x256xi1> to vector<1x256xi1>
    %98 = vector.broadcast %97 : vector<1x256xi1> to vector<8x256xi1>
    %99 = vector.broadcast %cst_69 : f32 to vector<8x256xf32>
    %100 = arith.select %98, %96, %99 : vector<8x256xi1>, vector<8x256xf32>
    %c16_70 = arith.constant 16 : index
    %c0_71 = arith.constant 0 : index
    %101 = vector.load %arg15[%c16_70, %c0_71] : memref<72x256xf32, #tpu.memory_space<vmem>>, vector<8x256xf32>
    tpu.vector_store %arg15[%c16_70, %c0_71], %100 {strides = array<i32>} : memref<72x256xf32, #tpu.memory_space<vmem>>, vector<8x256xf32>,
    %c0_72 = arith.constant 0 : index
    %c127_73 = arith.constant 127 : index
    %102 = vector.load %arg12[%c0_72, %c127_73] : memref<8x512xf32, #tpu.memory_space<vmem>>, vector<8x256xf32>
    %cst_74 = arith.constant 0.000000e+00 : f32
    %103 = vector.shape_cast %18 : vector<1x256xi1> to vector<1x256xi1>
    %104 = vector.broadcast %103 : vector<1x256xi1> to vector<8x256xi1>
    %105 = vector.broadcast %cst_74 : f32 to vector<8x256xf32>
    %106 = arith.select %104, %102, %105 : vector<8x256xi1>, vector<8x256xf32>
    %c24_75 = arith.constant 24 : index
    %c0_76 = arith.constant 0 : index
    %107 = vector.load %arg15[%c24_75, %c0_76] : memref<72x256xf32, #tpu.memory_space<vmem>>, vector<8x256xf32>
    tpu.vector_store %arg15[%c24_75, %c0_76], %106 {strides = array<i32>} : memref<72x256xf32, #tpu.memory_space<vmem>>, vector<8x256xf32>,
    %c0_77 = arith.constant 0 : index
    %c128_78 = arith.constant 128 : index
    %108 = vector.load %arg12[%c0_77, %c128_78] : memref<8x512xf32, #tpu.memory_space<vmem>>, vector<8x256xf32>
    %c32_79 = arith.constant 32 : index
    %c0_80 = arith.constant 0 : index
    %109 = vector.load %arg15[%c32_79, %c0_80] : memref<72x256xf32, #tpu.memory_space<vmem>>, vector<8x256xf32>
    tpu.vector_store %arg15[%c32_79, %c0_80], %108 {strides = array<i32>} : memref<72x256xf32, #tpu.memory_space<vmem>>, vector<8x256xf32>,
    %c0_81 = arith.constant 0 : index
    %c129_82 = arith.constant 129 : index
    %110 = vector.load %arg12[%c0_81, %c129_82] : memref<8x512xf32, #tpu.memory_space<vmem>>, vector<8x256xf32>
    %cst_83 = arith.constant 0.000000e+00 : f32
    %111 = vector.shape_cast %20 : vector<1x256xi1> to vector<1x256xi1>
    %112 = vector.broadcast %111 : vector<1x256xi1> to vector<8x256xi1>
    %113 = vector.broadcast %cst_83 : f32 to vector<8x256xf32>
    %114 = arith.select %112, %110, %113 : vector<8x256xi1>, vector<8x256xf32>
    %c40 = arith.constant 40 : index
    %c0_84 = arith.constant 0 : index
    %115 = vector.load %arg15[%c40, %c0_84] : memref<72x256xf32, #tpu.memory_space<vmem>>, vector<8x256xf32>
    tpu.vector_store %arg15[%c40, %c0_84], %114 {strides = array<i32>} : memref<72x256xf32, #tpu.memory_space<vmem>>, vector<8x256xf32>,
    %c0_85 = arith.constant 0 : index
    %c143_86 = arith.constant 143 : index
    %116 = vector.load %arg12[%c0_85, %c143_86] : memref<8x512xf32, #tpu.memory_space<vmem>>, vector<8x256xf32>
    %cst_87 = arith.constant 0.000000e+00 : f32
    %117 = vector.shape_cast %18 : vector<1x256xi1> to vector<1x256xi1>
    %118 = vector.broadcast %117 : vector<1x256xi1> to vector<8x256xi1>
    %119 = vector.broadcast %cst_87 : f32 to vector<8x256xf32>
    %120 = arith.select %118, %116, %119 : vector<8x256xi1>, vector<8x256xf32>
    %c48 = arith.constant 48 : index
    %c0_88 = arith.constant 0 : index
    %121 = vector.load %arg15[%c48, %c0_88] : memref<72x256xf32, #tpu.memory_space<vmem>>, vector<8x256xf32>
    tpu.vector_store %arg15[%c48, %c0_88], %120 {strides = array<i32>} : memref<72x256xf32, #tpu.memory_space<vmem>>, vector<8x256xf32>,
    %c0_89 = arith.constant 0 : index
    %c144_90 = arith.constant 144 : index
    %122 = vector.load %arg12[%c0_89, %c144_90] : memref<8x512xf32, #tpu.memory_space<vmem>>, vector<8x256xf32>
    %c56 = arith.constant 56 : index
    %c0_91 = arith.constant 0 : index
    %123 = vector.load %arg15[%c56, %c0_91] : memref<72x256xf32, #tpu.memory_space<vmem>>, vector<8x256xf32>
    tpu.vector_store %arg15[%c56, %c0_91], %122 {strides = array<i32>} : memref<72x256xf32, #tpu.memory_space<vmem>>, vector<8x256xf32>,
    %c0_92 = arith.constant 0 : index
    %c145_93 = arith.constant 145 : index
    %124 = vector.load %arg12[%c0_92, %c145_93] : memref<8x512xf32, #tpu.memory_space<vmem>>, vector<8x256xf32>
    %cst_94 = arith.constant 0.000000e+00 : f32
    %125 = vector.shape_cast %20 : vector<1x256xi1> to vector<1x256xi1>
    %126 = vector.broadcast %125 : vector<1x256xi1> to vector<8x256xi1>
    %127 = vector.broadcast %cst_94 : f32 to vector<8x256xf32>
    %128 = arith.select %126, %124, %127 : vector<8x256xi1>, vector<8x256xf32>
    %c64 = arith.constant 64 : index
    %c0_95 = arith.constant 0 : index
    %129 = vector.load %arg15[%c64, %c0_95] : memref<72x256xf32, #tpu.memory_space<vmem>>, vector<8x256xf32>
    tpu.vector_store %arg15[%c64, %c0_95], %128 {strides = array<i32>} : memref<72x256xf32, #tpu.memory_space<vmem>>, vector<8x256xf32>,
    %c0_96 = arith.constant 0 : index
    %c0_97 = arith.constant 0 : index
    %130 = vector.load %arg4[%c0_96, %c0_97] : memref<16x72xf32, #tpu.memory_space<vmem>>, vector<16x72xf32>
    %c0_98 = arith.constant 0 : index
    %c0_99 = arith.constant 0 : index
    %131 = vector.load %arg15[%c0_98, %c0_99] : memref<72x256xf32, #tpu.memory_space<vmem>>, vector<72x256xf32>
    %cst_100 = arith.constant dense<0.000000e+00> : vector<16x256xf32>
    %132 = tpu.matmul %130, %131, %cst_100 {dimension_numbers = #tpu.dot_dimension_numbers<[1], [0], [0], [1], [0, 0, 1, 1], [], []>} : vector<16x72xf32>, vector<72x256xf32>, vector<16x256xf32> -> vector<16x256xf32>
    %c0_101 = arith.constant 0 : index
    %c0_102 = arith.constant 0 : index
    %133 = vector.load %arg5[%c0_101, %c0_102] : memref<16x1xf32, #tpu.memory_space<vmem>>, vector<16x1xf32>
    %134 = vector.broadcast %133 : vector<16x1xf32> to vector<16x256xf32>
    %135 = arith.addf %132, %134 : vector<16x256xf32>
    %c0_103 = arith.constant 0 : index
    %136 = memref.load %arg6[%c0_103] : memref<1xf32, #tpu.memory_space<smem>>
    %cst_104 = arith.constant 0.000000e+00 : f32
    %137 = vector.broadcast %cst_104 : f32 to vector<16x256xf32>
    %138 = arith.cmpf oge, %135, %137 : vector<16x256xf32>
    %139 = vector.broadcast %136 : f32 to vector<16x256xf32>
    %140 = arith.mulf %139, %135 : vector<16x256xf32>
    %141 = arith.select %138, %135, %140 : vector<16x256xi1>, vector<16x256xf32>
    %c0_105 = arith.constant 0 : index
    %c128_106 = arith.constant 128 : index
    %142 = vector.load %arg13[%c0_105, %c128_106] : memref<16x512xf32, #tpu.memory_space<vmem>>, vector<16x256xf32>
    tpu.vector_store %arg13[%c0_105, %c128_106], %141 {strides = array<i32>} : memref<16x512xf32, #tpu.memory_space<vmem>>, vector<16x256xf32>,
    %c0_107 = arith.constant 0 : index
    %c111_108 = arith.constant 111 : index
    %143 = vector.load %arg13[%c0_107, %c111_108] : memref<16x512xf32, #tpu.memory_space<vmem>>, vector<16x256xf32>
    %cst_109 = arith.constant 0.000000e+00 : f32
    %144 = vector.shape_cast %18 : vector<1x256xi1> to vector<1x256xi1>
    %145 = vector.broadcast %144 : vector<1x256xi1> to vector<16x256xi1>
    %146 = vector.broadcast %cst_109 : f32 to vector<16x256xf32>
    %147 = arith.select %145, %143, %146 : vector<16x256xi1>, vector<16x256xf32>
    %c0_110 = arith.constant 0 : index
    %c0_111 = arith.constant 0 : index
    %148 = vector.load %arg16[%c0_110, %c0_111] : memref<144x256xf32, #tpu.memory_space<vmem>>, vector<16x256xf32>
    tpu.vector_store %arg16[%c0_110, %c0_111], %147 {strides = array<i32>} : memref<144x256xf32, #tpu.memory_space<vmem>>, vector<16x256xf32>,
    %c0_112 = arith.constant 0 : index
    %c112_113 = arith.constant 112 : index
    %149 = vector.load %arg13[%c0_112, %c112_113] : memref<16x512xf32, #tpu.memory_space<vmem>>, vector<16x256xf32>
    %c16_114 = arith.constant 16 : index
    %c0_115 = arith.constant 0 : index
    %150 = vector.load %arg16[%c16_114, %c0_115] : memref<144x256xf32, #tpu.memory_space<vmem>>, vector<16x256xf32>
    tpu.vector_store %arg16[%c16_114, %c0_115], %149 {strides = array<i32>} : memref<144x256xf32, #tpu.memory_space<vmem>>, vector<16x256xf32>,
    %c0_116 = arith.constant 0 : index
    %c113_117 = arith.constant 113 : index
    %151 = vector.load %arg13[%c0_116, %c113_117] : memref<16x512xf32, #tpu.memory_space<vmem>>, vector<16x256xf32>
    %cst_118 = arith.constant 0.000000e+00 : f32
    %152 = vector.shape_cast %20 : vector<1x256xi1> to vector<1x256xi1>
    %153 = vector.broadcast %152 : vector<1x256xi1> to vector<16x256xi1>
    %154 = vector.broadcast %cst_118 : f32 to vector<16x256xf32>
    %155 = arith.select %153, %151, %154 : vector<16x256xi1>, vector<16x256xf32>
    %c32_119 = arith.constant 32 : index
    %c0_120 = arith.constant 0 : index
    %156 = vector.load %arg16[%c32_119, %c0_120] : memref<144x256xf32, #tpu.memory_space<vmem>>, vector<16x256xf32>
    tpu.vector_store %arg16[%c32_119, %c0_120], %155 {strides = array<i32>} : memref<144x256xf32, #tpu.memory_space<vmem>>, vector<16x256xf32>,
    %c0_121 = arith.constant 0 : index
    %c127_122 = arith.constant 127 : index
    %157 = vector.load %arg13[%c0_121, %c127_122] : memref<16x512xf32, #tpu.memory_space<vmem>>, vector<16x256xf32>
    %cst_123 = arith.constant 0.000000e+00 : f32
    %158 = vector.shape_cast %18 : vector<1x256xi1> to vector<1x256xi1>
    %159 = vector.broadcast %158 : vector<1x256xi1> to vector<16x256xi1>
    %160 = vector.broadcast %cst_123 : f32 to vector<16x256xf32>
    %161 = arith.select %159, %157, %160 : vector<16x256xi1>, vector<16x256xf32>
    %c48_124 = arith.constant 48 : index
    %c0_125 = arith.constant 0 : index
    %162 = vector.load %arg16[%c48_124, %c0_125] : memref<144x256xf32, #tpu.memory_space<vmem>>, vector<16x256xf32>
    tpu.vector_store %arg16[%c48_124, %c0_125], %161 {strides = array<i32>} : memref<144x256xf32, #tpu.memory_space<vmem>>, vector<16x256xf32>,
    %c0_126 = arith.constant 0 : index
    %c128_127 = arith.constant 128 : index
    %163 = vector.load %arg13[%c0_126, %c128_127] : memref<16x512xf32, #tpu.memory_space<vmem>>, vector<16x256xf32>
    %c64_128 = arith.constant 64 : index
    %c0_129 = arith.constant 0 : index
    %164 = vector.load %arg16[%c64_128, %c0_129] : memref<144x256xf32, #tpu.memory_space<vmem>>, vector<16x256xf32>
    tpu.vector_store %arg16[%c64_128, %c0_129], %163 {strides = array<i32>} : memref<144x256xf32, #tpu.memory_space<vmem>>, vector<16x256xf32>,
    %c0_130 = arith.constant 0 : index
    %c129_131 = arith.constant 129 : index
    %165 = vector.load %arg13[%c0_130, %c129_131] : memref<16x512xf32, #tpu.memory_space<vmem>>, vector<16x256xf32>
    %cst_132 = arith.constant 0.000000e+00 : f32
    %166 = vector.shape_cast %20 : vector<1x256xi1> to vector<1x256xi1>
    %167 = vector.broadcast %166 : vector<1x256xi1> to vector<16x256xi1>
    %168 = vector.broadcast %cst_132 : f32 to vector<16x256xf32>
    %169 = arith.select %167, %165, %168 : vector<16x256xi1>, vector<16x256xf32>
    %c80 = arith.constant 80 : index
    %c0_133 = arith.constant 0 : index
    %170 = vector.load %arg16[%c80, %c0_133] : memref<144x256xf32, #tpu.memory_space<vmem>>, vector<16x256xf32>
    tpu.vector_store %arg16[%c80, %c0_133], %169 {strides = array<i32>} : memref<144x256xf32, #tpu.memory_space<vmem>>, vector<16x256xf32>,
    %c0_134 = arith.constant 0 : index
    %c143_135 = arith.constant 143 : index
    %171 = vector.load %arg13[%c0_134, %c143_135] : memref<16x512xf32, #tpu.memory_space<vmem>>, vector<16x256xf32>
    %cst_136 = arith.constant 0.000000e+00 : f32
    %172 = vector.shape_cast %18 : vector<1x256xi1> to vector<1x256xi1>
    %173 = vector.broadcast %172 : vector<1x256xi1> to vector<16x256xi1>
    %174 = vector.broadcast %cst_136 : f32 to vector<16x256xf32>
    %175 = arith.select %173, %171, %174 : vector<16x256xi1>, vector<16x256xf32>
    %c96 = arith.constant 96 : index
    %c0_137 = arith.constant 0 : index
    %176 = vector.load %arg16[%c96, %c0_137] : memref<144x256xf32, #tpu.memory_space<vmem>>, vector<16x256xf32>
    tpu.vector_store %arg16[%c96, %c0_137], %175 {strides = array<i32>} : memref<144x256xf32, #tpu.memory_space<vmem>>, vector<16x256xf32>,
    %c0_138 = arith.constant 0 : index
    %c144_139 = arith.constant 144 : index
    %177 = vector.load %arg13[%c0_138, %c144_139] : memref<16x512xf32, #tpu.memory_space<vmem>>, vector<16x256xf32>
    %c112_140 = arith.constant 112 : index
    %c0_141 = arith.constant 0 : index
    %178 = vector.load %arg16[%c112_140, %c0_141] : memref<144x256xf32, #tpu.memory_space<vmem>>, vector<16x256xf32>
    tpu.vector_store %arg16[%c112_140, %c0_141], %177 {strides = array<i32>} : memref<144x256xf32, #tpu.memory_space<vmem>>, vector<16x256xf32>,
    %c0_142 = arith.constant 0 : index
    %c145_143 = arith.constant 145 : index
    %179 = vector.load %arg13[%c0_142, %c145_143] : memref<16x512xf32, #tpu.memory_space<vmem>>, vector<16x256xf32>
    %cst_144 = arith.constant 0.000000e+00 : f32
    %180 = vector.shape_cast %20 : vector<1x256xi1> to vector<1x256xi1>
    %181 = vector.broadcast %180 : vector<1x256xi1> to vector<16x256xi1>
    %182 = vector.broadcast %cst_144 : f32 to vector<16x256xf32>
    %183 = arith.select %181, %179, %182 : vector<16x256xi1>, vector<16x256xf32>
    %c128_145 = arith.constant 128 : index
    %c0_146 = arith.constant 0 : index
    %184 = vector.load %arg16[%c128_145, %c0_146] : memref<144x256xf32, #tpu.memory_space<vmem>>, vector<16x256xf32>
    tpu.vector_store %arg16[%c128_145, %c0_146], %183 {strides = array<i32>} : memref<144x256xf32, #tpu.memory_space<vmem>>, vector<16x256xf32>,
    %c0_147 = arith.constant 0 : index
    %c0_148 = arith.constant 0 : index
    %185 = vector.load %arg7[%c0_147, %c0_148] : memref<8x144xf32, #tpu.memory_space<vmem>>, vector<8x144xf32>
    %c0_149 = arith.constant 0 : index
    %c0_150 = arith.constant 0 : index
    %186 = vector.load %arg16[%c0_149, %c0_150] : memref<144x256xf32, #tpu.memory_space<vmem>>, vector<144x256xf32>
    %cst_151 = arith.constant dense<0.000000e+00> : vector<8x256xf32>
    %187 = tpu.matmul %185, %186, %cst_151 {dimension_numbers = #tpu.dot_dimension_numbers<[1], [0], [0], [1], [0, 0, 1, 1], [], []>} : vector<8x144xf32>, vector<144x256xf32>, vector<8x256xf32> -> vector<8x256xf32>
    %c0_152 = arith.constant 0 : index
    %c0_153 = arith.constant 0 : index
    %188 = vector.load %arg8[%c0_152, %c0_153] : memref<8x1xf32, #tpu.memory_space<vmem>>, vector<8x1xf32>
    %189 = vector.broadcast %188 : vector<8x1xf32> to vector<8x256xf32>
    %190 = arith.addf %187, %189 : vector<8x256xf32>
    %c0_154 = arith.constant 0 : index
    %191 = memref.load %arg9[%c0_154] : memref<1xf32, #tpu.memory_space<smem>>
    %cst_155 = arith.constant 0.000000e+00 : f32
    %192 = vector.broadcast %cst_155 : f32 to vector<8x256xf32>
    %193 = arith.cmpf oge, %190, %192 : vector<8x256xf32>
    %194 = vector.broadcast %191 : f32 to vector<8x256xf32>
    %195 = arith.mulf %194, %190 : vector<8x256xf32>
    %196 = arith.select %193, %190, %195 : vector<8x256xi1>, vector<8x256xf32>
    %c0_156 = arith.constant 0 : index
    %c0_157 = arith.constant 0 : index
    %c0_158 = arith.constant 0 : index
    %197 = vector.load %arg10[%c0_156, %c0_157, %c0_158] : memref<1x8x256xf32, #tpu.memory_space<vmem>>, vector<1x8x256xf32>
    %198 = vector.shape_cast %197 : vector<1x8x256xf32> to vector<8x256xf32>
    %199 = vector.shape_cast %196 : vector<8x256xf32> to vector<1x8x256xf32>
    tpu.vector_store %arg10[%c0_156, %c0_157, %c0_158], %199 {strides = array<i32>} : memref<1x8x256xf32, #tpu.memory_space<vmem>>, vector<1x8x256xf32>,
    return
  }
  func.func @transform_0(%arg0: i32) -> (i32, i32, i32) {
    %c0_i32 = arith.constant 0 : i32
    %c0_i32_0 = arith.constant 0 : i32
    %c0_i32_1 = arith.constant 0 : i32
    return %arg0, %c0_i32, %c0_i32_0 : i32, i32, i32
  }
  func.func @transform_1(%arg0: i32) -> (i32, i32) {
    %c0_i32 = arith.constant 0 : i32
    %c0_i32_0 = arith.constant 0 : i32
    %c0_i32_1 = arith.constant 0 : i32
    return %c0_i32, %c0_i32_0 : i32, i32
  }
  func.func @transform_2(%arg0: i32) -> i32 {
    %c0_i32 = arith.constant 0 : i32
    %c0_i32_0 = arith.constant 0 : i32
    return %c0_i32 : i32
  }
  func.func @transform_3(%arg0: i32) -> (i32, i32) {
    %c0_i32 = arith.constant 0 : i32
    %c0_i32_0 = arith.constant 0 : i32
    %c0_i32_1 = arith.constant 0 : i32
    return %c0_i32, %c0_i32_0 : i32, i32
  }
  func.func @transform_4(%arg0: i32) -> (i32, i32) {
    %c0_i32 = arith.constant 0 : i32
    %c0_i32_0 = arith.constant 0 : i32
    %c0_i32_1 = arith.constant 0 : i32
    return %c0_i32, %c0_i32_0 : i32, i32
  }
  func.func @transform_5(%arg0: i32) -> i32 {
    %c0_i32 = arith.constant 0 : i32
    %c0_i32_0 = arith.constant 0 : i32
    return %c0_i32 : i32
  }
  func.func @transform_6(%arg0: i32) -> (i32, i32) {
    %c0_i32 = arith.constant 0 : i32
    %c0_i32_0 = arith.constant 0 : i32
    %c0_i32_1 = arith.constant 0 : i32
    return %c0_i32, %c0_i32_0 : i32, i32
  }
  func.func @transform_7(%arg0: i32) -> (i32, i32) {
    %c0_i32 = arith.constant 0 : i32
    %c0_i32_0 = arith.constant 0 : i32
    %c0_i32_1 = arith.constant 0 : i32
    return %c0_i32, %c0_i32_0 : i32, i32
  }
  func.func @transform_8(%arg0: i32) -> i32 {
    %c0_i32 = arith.constant 0 : i32
    %c0_i32_0 = arith.constant 0 : i32
    return %c0_i32 : i32
  }
  func.func @transform_9(%arg0: i32) -> (i32, i32, i32) {
    %c0_i32 = arith.constant 0 : i32
    %c0_i32_0 = arith.constant 0 : i32
    %c0_i32_1 = arith.constant 0 : i32
    return %arg0, %c0_i32, %c0_i32_0 : i32, i32, i32
  }
}

</mosaic_0001>

<llo_original>
// kernel: begin_block_forward.1
$region0: #{begin_block_forward.1}
  #allocation0 [shape = 'u32[]', space=smem, size = 0x4, offset = 0x4, fixed_abs, tag = 'smem constant byte address 0x4 - core index']
  #allocation1 [shape = 'u32[144,128]{1,0:T(1,128)}', space=vmem, size = 0x12000, scoped, tag = 'internal scratch']
  #allocation2 [shape = 'f32[4,512]{1,0:T(4,128)}', space=vmem, size = 0x2000, scoped, tag = 'scratch operand']
  #allocation3 [shape = 'f32[8,512]{1,0:T(8,128)}', space=vmem, size = 0x4000, scoped, tag = 'scratch operand']
  #allocation4 [shape = 'f32[16,512]{1,0:T(8,128)}', space=vmem, size = 0x8000, scoped, tag = 'scratch operand']
  #allocation5 [shape = 'f32[36,256]{1,0:T(8,128)}', space=vmem, size = 0xa000, scoped, tag = 'scratch operand']
  #allocation6 [shape = 'f32[72,256]{1,0:T(8,128)}', space=vmem, size = 0x12000, scoped, tag = 'scratch operand']
  #allocation7 [shape = 'f32[144,256]{1,0:T(8,128)}', space=vmem, size = 0x24000, scoped, tag = 'scratch operand']
  #allocation8 [shape = 'f32[1]{0:T(128)S(6)}', space=smem, size = 0x200, scoped, tag = 'scoped memory for begin_block_forward.1']
  #allocation9 [shape = 'f32[1]{0:T(128)S(6)}', space=smem, size = 0x200, scoped, tag = 'scoped memory for begin_block_forward.1']
  #allocation10 [shape = 'f32[1]{0:T(128)S(6)}', space=smem, size = 0x200, scoped, tag = 'scoped memory for begin_block_forward.1']
  %s0 = inlined_call_operand.vmem [shape: f32[2,4,256], index: 0, kind: input, shape index: {}]
  %s1 = inlined_call_operand.vmem [shape: f32[8,36], index: 1, kind: input, shape index: {}]
  %s2 = inlined_call_operand.<no memory space> [shape: f32[1], index: 2, kind: input, shape index: {}]
  %s3 = inlined_call_operand.vmem [shape: f32[16,72], index: 3, kind: input, shape index: {}]
  %s4 = inlined_call_operand.vmem [shape: f32[16,1], index: 4, kind: input, shape index: {}]
  %s5 = inlined_call_operand.<no memory space> [shape: f32[1], index: 5, kind: input, shape index: {}]
  %s6 = inlined_call_operand.vmem [shape: f32[8,144], index: 6, kind: input, shape index: {}]
  %s7 = inlined_call_operand.vmem [shape: f32[8,1], index: 7, kind: input, shape index: {}]
  %s8 = inlined_call_operand.<no memory space> [shape: f32[1], index: 8, kind: input, shape index: {}]
  %s9 = inlined_call_operand.vmem [shape: f32[2,8,256], index: 9, kind: output, shape index: {}]
  %s10 = sld [smem:[#allocation0]]
  $region69: #{begin_block_forward.1} parent=0
    _
  %s12 = ssub.s32 1, %s10
  %s13 = scalar_select 0, %s12, %s10
  %14 = sst [smem:[#allocation8]] %s2
  %15 = sst [smem:[#allocation9]] %s5
  %16 = sst [smem:[#allocation10]] %s8
  loop: start=0, step=1, limit=4
  $region2: #{begin_block_forward.1} parent=0 // loop_pre_header
    _
  $region3: #{begin_block_forward.1} parent=0 // loop_header
    %s18 = sphi 0, %s22
    %p19 = scmp.ge.s32.totalorder %s18, 4
    %s28 = sphi 0, %s30
    %s31 = sphi 0, %s28
    %s32 = sphi 0, %s31
    %s48 = sphi 0, %s32
    %s52 = sphi 0, %s52
    %s54 = sphi 0, %s52
    %s55 = sphi 0, %s54
    %s69 = sphi 0, %s55
    %s73 = sphi 0, %s73
    %s75 = sphi 0, %s73
    %s76 = sphi 0, %s75
    %s90 = sphi 0, %s76
    %s94 = sphi 0, %s94
    %s96 = sphi 0, %s94
    %s97 = sphi 0, %s96
    %s111 = sphi 0, %s97
    %s115 = sphi 0, %s115
    %s117 = sphi 0, %s115
    %s118 = sphi 0, %s117
    %s132 = sphi 0, %s118
    %s136 = sphi 0, %s136
    %s138 = sphi 0, %s136
    %s139 = sphi 0, %s138
    %s153 = sphi 0, %s139
    %s157 = sphi 0, %s157
    %s159 = sphi 0, %s157
    %s160 = sphi 0, %s159
    %s174 = sphi 0, %s160
    %s178 = sphi 0, %s178
    %s180 = sphi 0, %s178
    %s181 = sphi 0, %s180
    %s195 = sphi 0, %s181
    %s199 = sphi 0, %s199
    %s201 = sphi 0, %s199
    %s202 = sphi 0, %s201
    %s216 = sphi 0, %s202
    %s222 = sphi 0, %s224
    %s225 = sphi 0, %s222
    %s226 = sphi 0, %s225
    %s242 = sphi 0, %s226
  $region4: #{begin_block_forward.1} parent=0 // loop_header_branch
    %21 = sbr.rel (%p19) target = $region8
  $region5: #{begin_block_forward.1} parent=0 // loop_body
    %s23 = ssub.s32 %s18, 1
    %s24 = ssub.s32 %s18, 2
    %s25 = sadd.s32 %s18, 1
    %s26 = ssub.s32 %s18, %s25
    %p27 = scmp.eq.s32.totalorder %s26, 0
    %s29 = sadd.s32 %s28, 1
    %s30 = scalar_select %p27, %s28, %s29
    %p33 = pneg %p27
    %p34 = scmp.eq.s32.totalorder %s18, 1
    %p35 = por %p33, %p34
    %p36 = scmp.ne.s32.totalorder %s28, %s31
    %p37 = scmp.eq.s32.totalorder %s18, 0
    %p38 = por %p36, %p37
    %p39 = scmp.ne.s32.totalorder %s28, %s31
    %p40 = scmp.eq.s32.totalorder %s23, 1
    %p41 = por %p39, %p40
    %p42 = scmp.ne.s32.totalorder %s31, %s32
    %p43 = scmp.eq.s32.totalorder %s23, 0
    %p44 = por %p42, %p43
    %p45 = scmp.ne.s32.totalorder %s31, %s32
    %p46 = scmp.eq.s32.totalorder %s24, 1
    %p47 = por %p45, %p46
    %p49 = scmp.ne.s32.totalorder %s32, %s48
    %p50 = scmp.eq.s32.totalorder %s24, 0
    %p51 = por %p49, %p50
    %s53 = sadd.s32 %s52, 1
    %p56 = scmp.eq.s32.totalorder %s18, 1
    %p57 = scmp.ne.s32.totalorder %s52, %s54
    %p58 = scmp.eq.s32.totalorder %s18, 0
    %p59 = por %p57, %p58
    %p60 = scmp.ne.s32.totalorder %s52, %s54
    %p61 = scmp.eq.s32.totalorder %s23, 1
    %p62 = por %p60, %p61
    %p63 = scmp.ne.s32.totalorder %s54, %s55
    %p64 = scmp.eq.s32.totalorder %s23, 0
    %p65 = por %p63, %p64
    %p66 = scmp.ne.s32.totalorder %s54, %s55
    %p67 = scmp.eq.s32.totalorder %s24, 1
    %p68 = por %p66, %p67
    %p70 = scmp.ne.s32.totalorder %s55, %s69
    %p71 = scmp.eq.s32.totalorder %s24, 0
    %p72 = por %p70, %p71
    %s74 = sadd.s32 %s73, 1
    %p77 = scmp.eq.s32.totalorder %s18, 1
    %p78 = scmp.ne.s32.totalorder %s73, %s75
    %p79 = scmp.eq.s32.totalorder %s18, 0
    %p80 = por %p78, %p79
    %p81 = scmp.ne.s32.totalorder %s73, %s75
    %p82 = scmp.eq.s32.totalorder %s23, 1
    %p83 = por %p81, %p82
    %p84 = scmp.ne.s32.totalorder %s75, %s76
    %p85 = scmp.eq.s32.totalorder %s23, 0
    %p86 = por %p84, %p85
    %p87 = scmp.ne.s32.totalorder %s75, %s76
    %p88 = scmp.eq.s32.totalorder %s24, 1
    %p89 = por %p87, %p88
    %p91 = scmp.ne.s32.totalorder %s76, %s90
    %p92 = scmp.eq.s32.totalorder %s24, 0
    %p93 = por %p91, %p92
    %s95 = sadd.s32 %s94, 1
    %p98 = scmp.eq.s32.totalorder %s18, 1
    %p99 = scmp.ne.s32.totalorder %s94, %s96
    %p100 = scmp.eq.s32.totalorder %s18, 0
    %p101 = por %p99, %p100
    %p102 = scmp.ne.s32.totalorder %s94, %s96
    %p103 = scmp.eq.s32.totalorder %s23, 1
    %p104 = por %p102, %p103
    %p105 = scmp.ne.s32.totalorder %s96, %s97
    %p106 = scmp.eq.s32.totalorder %s23, 0
    %p107 = por %p105, %p106
    %p108 = scmp.ne.s32.totalorder %s96, %s97
    %p109 = scmp.eq.s32.totalorder %s24, 1
    %p110 = por %p108, %p109
    %p112 = scmp.ne.s32.totalorder %s97, %s111
    %p113 = scmp.eq.s32.totalorder %s24, 0
    %p114 = por %p112, %p113
    %s116 = sadd.s32 %s115, 1
    %p119 = scmp.eq.s32.totalorder %s18, 1
    %p120 = scmp.ne.s32.totalorder %s115, %s117
    %p121 = scmp.eq.s32.totalorder %s18, 0
    %p122 = por %p120, %p121
    %p123 = scmp.ne.s32.totalorder %s115, %s117
    %p124 = scmp.eq.s32.totalorder %s23, 1
    %p125 = por %p123, %p124
    %p126 = scmp.ne.s32.totalorder %s117, %s118
    %p127 = scmp.eq.s32.totalorder %s23, 0
    %p128 = por %p126, %p127
    %p129 = scmp.ne.s32.totalorder %s117, %s118
    %p130 = scmp.eq.s32.totalorder %s24, 1
    %p131 = por %p129, %p130
    %p133 = scmp.ne.s32.totalorder %s118, %s132
    %p134 = scmp.eq.s32.totalorder %s24, 0
    %p135 = por %p133, %p134
    %s137 = sadd.s32 %s136, 1
    %p140 = scmp.eq.s32.totalorder %s18, 1
    %p141 = scmp.ne.s32.totalorder %s136, %s138
    %p142 = scmp.eq.s32.totalorder %s18, 0
    %p143 = por %p141, %p142
    %p144 = scmp.ne.s32.totalorder %s136, %s138
    %p145 = scmp.eq.s32.totalorder %s23, 1
    %p146 = por %p144, %p145
    %p147 = scmp.ne.s32.totalorder %s138, %s139
    %p148 = scmp.eq.s32.totalorder %s23, 0
    %p149 = por %p147, %p148
    %p150 = scmp.ne.s32.totalorder %s138, %s139
    %p151 = scmp.eq.s32.totalorder %s24, 1
    %p152 = por %p150, %p151
    %p154 = scmp.ne.s32.totalorder %s139, %s153
    %p155 = scmp.eq.s32.totalorder %s24, 0
    %p156 = por %p154, %p155
    %s158 = sadd.s32 %s157, 1
    %p161 = scmp.eq.s32.totalorder %s18, 1
    %p162 = scmp.ne.s32.totalorder %s157, %s159
    %p163 = scmp.eq.s32.totalorder %s18, 0
    %p164 = por %p162, %p163
    %p165 = scmp.ne.s32.totalorder %s157, %s159
    %p166 = scmp.eq.s32.totalorder %s23, 1
    %p167 = por %p165, %p166
    %p168 = scmp.ne.s32.totalorder %s159, %s160
    %p169 = scmp.eq.s32.totalorder %s23, 0
    %p170 = por %p168, %p169
    %p171 = scmp.ne.s32.totalorder %s159, %s160
    %p172 = scmp.eq.s32.totalorder %s24, 1
    %p173 = por %p171, %p172
    %p175 = scmp.ne.s32.totalorder %s160, %s174
    %p176 = scmp.eq.s32.totalorder %s24, 0
    %p177 = por %p175, %p176
    %s179 = sadd.s32 %s178, 1
    %p182 = scmp.eq.s32.totalorder %s18, 1
    %p183 = scmp.ne.s32.totalorder %s178, %s180
    %p184 = scmp.eq.s32.totalorder %s18, 0
    %p185 = por %p183, %p184
    %p186 = scmp.ne.s32.totalorder %s178, %s180
    %p187 = scmp.eq.s32.totalorder %s23, 1
    %p188 = por %p186, %p187
    %p189 = scmp.ne.s32.totalorder %s180, %s181
    %p190 = scmp.eq.s32.totalorder %s23, 0
    %p191 = por %p189, %p190
    %p192 = scmp.ne.s32.totalorder %s180, %s181
    %p193 = scmp.eq.s32.totalorder %s24, 1
    %p194 = por %p192, %p193
    %p196 = scmp.ne.s32.totalorder %s181, %s195
    %p197 = scmp.eq.s32.totalorder %s24, 0
    %p198 = por %p196, %p197
    %s200 = sadd.s32 %s199, 1
    %p203 = scmp.eq.s32.totalorder %s18, 1
    %p204 = scmp.ne.s32.totalorder %s199, %s201
    %p205 = scmp.eq.s32.totalorder %s18, 0
    %p206 = por %p204, %p205
    %p207 = scmp.ne.s32.totalorder %s199, %s201
    %p208 = scmp.eq.s32.totalorder %s23, 1
    %p209 = por %p207, %p208
    %p210 = scmp.ne.s32.totalorder %s201, %s202
    %p211 = scmp.eq.s32.totalorder %s23, 0
    %p212 = por %p210, %p211
    %p213 = scmp.ne.s32.totalorder %s201, %s202
    %p214 = scmp.eq.s32.totalorder %s24, 1
    %p215 = por %p213, %p214
    %p217 = scmp.ne.s32.totalorder %s202, %s216
    %p218 = scmp.eq.s32.totalorder %s24, 0
    %p219 = por %p217, %p218
    %s220 = ssub.s32 %s18, %s25
    %p221 = scmp.eq.s32.totalorder %s220, 0
    %s223 = sadd.s32 %s222, 1
    %s224 = scalar_select %p221, %s222, %s223
    %p227 = pneg %p221
    %p228 = scmp.eq.s32.totalorder %s18, 1
    %p229 = por %p227, %p228
    %p230 = scmp.ne.s32.totalorder %s222, %s225
    %p231 = scmp.eq.s32.totalorder %s18, 0
    %p232 = por %p230, %p231
    %p233 = scmp.ne.s32.totalorder %s222, %s225
    %p234 = scmp.eq.s32.totalorder %s23, 1
    %p235 = por %p233, %p234
    %p236 = scmp.ne.s32.totalorder %s225, %s226
    %p237 = scmp.eq.s32.totalorder %s23, 0
    %p238 = por %p236, %p237
    %p239 = scmp.ne.s32.totalorder %s225, %s226
    %p240 = scmp.eq.s32.totalorder %s24, 1
    %p241 = por %p239, %p240
    %p243 = scmp.ne.s32.totalorder %s226, %s242
    %p244 = scmp.eq.s32.totalorder %s24, 0
    %p245 = por %p243, %p244
    %p246 = scmp.le.s32.totalorder 1, %s18
    %p247 = scmp.lt.s32.totalorder %s18, 3
    %p248 = pnand %p246, %p247
    %p249 = pneg %p248
    // Predicated region
    $region9: #{begin_block_forward.1} parent=5 // pred_check
      _
    $region10: #{begin_block_forward.1} parent=5 // pred_check_branch
      %251 = sbr.rel (%p248) target = $region12
    $region11: #{begin_block_forward.1} parent=5 // pred_region
      %s252 = ssub.s32 %s18, 1
      // Predicated region
      $region13: #{begin_block_forward.1} parent=11 // pred_check
        %p253 = pneg %p65
      $region14: #{begin_block_forward.1} parent=11 // pred_check_branch
        %255 = sbr.rel (%p253) target = $region16
      $region15: #{begin_block_forward.1} parent=11 // pred_region
        _
      $region16: #{begin_block_forward.1} parent=11 // pred_fallthru
        _
      // Predicated region
      $region17: #{begin_block_forward.1} parent=11 // pred_check
        %p256 = pneg %p86
      $region18: #{begin_block_forward.1} parent=11 // pred_check_branch
        %258 = sbr.rel (%p256) target = $region20
      $region19: #{begin_block_forward.1} parent=11 // pred_region
        _
      $region20: #{begin_block_forward.1} parent=11 // pred_fallthru
        _
      // Predicated region
      $region21: #{begin_block_forward.1} parent=11 // pred_check
        %p259 = pneg %p107
      $region22: #{begin_block_forward.1} parent=11 // pred_check_branch
        %261 = sbr.rel (%p259) target = $region24
      $region23: #{begin_block_forward.1} parent=11 // pred_region
        _
      $region24: #{begin_block_forward.1} parent=11 // pred_fallthru
        _
      // Predicated region
      $region25: #{begin_block_forward.1} parent=11 // pred_check
        %p262 = pneg %p128
      $region26: #{begin_block_forward.1} parent=11 // pred_check_branch
        %264 = sbr.rel (%p262) target = $region28
      $region27: #{begin_block_forward.1} parent=11 // pred_region
        _
      $region28: #{begin_block_forward.1} parent=11 // pred_fallthru
        _
      // Predicated region
      $region29: #{begin_block_forward.1} parent=11 // pred_check
        %p265 = pneg %p149
      $region30: #{begin_block_forward.1} parent=11 // pred_check_branch
        %267 = sbr.rel (%p265) target = $region32
      $region31: #{begin_block_forward.1} parent=11 // pred_region
        _
      $region32: #{begin_block_forward.1} parent=11 // pred_fallthru
        _
      // Predicated region
      $region33: #{begin_block_forward.1} parent=11 // pred_check
        %p268 = pneg %p170
      $region34: #{begin_block_forward.1} parent=11 // pred_check_branch
        %270 = sbr.rel (%p268) target = $region36
      $region35: #{begin_block_forward.1} parent=11 // pred_region
        _
      $region36: #{begin_block_forward.1} parent=11 // pred_fallthru
        _
      // Predicated region
      $region37: #{begin_block_forward.1} parent=11 // pred_check
        %p271 = pneg %p191
      $region38: #{begin_block_forward.1} parent=11 // pred_check_branch
        %273 = sbr.rel (%p271) target = $region40
      $region39: #{begin_block_forward.1} parent=11 // pred_region
        _
      $region40: #{begin_block_forward.1} parent=11 // pred_fallthru
        _
      // Predicated region
      $region41: #{begin_block_forward.1} parent=11 // pred_check
        %p274 = pneg %p212
      $region42: #{begin_block_forward.1} parent=11 // pred_check_branch
        %276 = sbr.rel (%p274) target = $region44
      $region43: #{begin_block_forward.1} parent=11 // pred_region
        _
      $region44: #{begin_block_forward.1} parent=11 // pred_fallthru
        _
    $region12: #{begin_block_forward.1} parent=5 // pred_fallthru
      _
    %p277 = scmp.lt.s32.totalorder %s18, 2
    // Predicated region
    $region45: #{begin_block_forward.1} parent=5 // pred_check
      %p278 = pneg %p277
    $region46: #{begin_block_forward.1} parent=5 // pred_check_branch
      %280 = sbr.rel (%p278) target = $region48
    $region47: #{begin_block_forward.1} parent=5 // pred_region
      // Predicated region
      $region49: #{begin_block_forward.1} parent=47 // pred_check
        %p281 = pneg %p38
      $region50: #{begin_block_forward.1} parent=47 // pred_check_branch
        %283 = sbr.rel (%p281) target = $region52
      $region51: #{begin_block_forward.1} parent=47 // pred_region
        %p284 = scmp.lt.s32.totalorder %s18, 1
        %s285 = scalar_select %p284, %s18, 1
        %s286 = smul.addr %s285, 2
        %s287 = smul.addr %s286, 4
        %s288 = scalar_lea.vmem %s0, %s287
      $region52: #{begin_block_forward.1} parent=47 // pred_fallthru
        _
    $region48: #{begin_block_forward.1} parent=5 // pred_fallthru
      _
    %p289 = scmp.le.s32.totalorder 1, %s18
    %p290 = scmp.lt.s32.totalorder %s18, 3
    %p291 = pnand %p289, %p290
    %p292 = pneg %p291
    // Predicated region
    $region53: #{begin_block_forward.1} parent=5 // pred_check
      _
    $region54: #{begin_block_forward.1} parent=5 // pred_check_branch
      %294 = sbr.rel (%p291) target = $region56
    $region55: #{begin_block_forward.1} parent=5 // pred_region
      %s295 = ssub.s32 %s18, 1
      %p296 = scmp.lt.s32.totalorder %s23, 1
      %s297 = scalar_select %p296, %s23, 1
      %s298 = smul.addr %s297, 2
      %s299 = smul.addr %s298, 4
      %s300 = scalar_lea.vmem %s0, %s299
      %p301 = pneg %p44
      %p302 = pneg %p41
      %p303 = pneg %p65
      %p304 = pneg %p62
      %p305 = pneg %p86
      %p306 = pneg %p83
      %p307 = pneg %p107
      %p308 = pneg %p104
      %p309 = pneg %p128
      %p310 = pneg %p125
      %p311 = pneg %p149
      %p312 = pneg %p146
      %p313 = pneg %p170
      %p314 = pneg %p167
      %p315 = pneg %p191
      %p316 = pneg %p188
      %p317 = pneg %p212
      %p318 = pneg %p209
      %p319 = pneg %p238
      %p320 = pneg %p235
      %p321 = scmp.lt.s32.totalorder %s23, 1
      %s322 = scalar_select %p321, %s23, 1
      %s323 = smul.addr %s322, 2
      %s324 = smul.addr %s323, 8
      %s325 = scalar_lea.vmem %s9, %s324
      %p326 = scmp.lt.s32.totalorder %s23, 1
      %s327 = scalar_select %p326, %s23, 1
      %s328 = smul.addr %s327, 2
      %s329 = smul.addr %s328, 4
      %s330 = scalar_lea.vmem %s0, %s329
      %p331 = scmp.lt.s32.totalorder %s23, 1
      %s332 = scalar_select %p331, %s23, 1
      %s333 = smul.addr %s332, 2
      %s334 = smul.addr %s333, 8
      %s335 = scalar_lea.vmem %s9, %s334
      %v336 = vlaneseq
      %v337 = vand.u32 %v336, 127
      %v338 = vadd.s32 %v337, 128
      %vm339 = vcmp.lt.s32.totalorder %v337, 0
      %v340 = vsub.s32 0, %v337
      %v341 = vsel %vm339, %v340, %v337
      %v342 = vshrl.u32 %v341, 4
      %v343 = vand.u32 %v341, 15
      %v344 = vsub.s32 0, %v343
      %v345 = vsel %vm339, %v344, %v343
      %vm346 = vcmp.lt.s32.totalorder %v338, 0
      %v347 = vsub.s32 0, %v338
      %v348 = vsel %vm346, %v347, %v338
      %v349 = vshrl.u32 %v348, 4
      %v350 = vand.u32 %v348, 15
      %v351 = vsub.s32 0, %v350
      %v352 = vsel %vm346, %v351, %v350
      %vm353 = vcmp.ne.s32.totalorder %v345, 0
      %vm354 = vcmp.ne.s32.totalorder %v352, 0
      %vm355 = vcmp.lt.s32.totalorder %v345, 0
      %vm356 = vcmp.lt.s32.totalorder %v352, 0
      %vm357 = vmand %vm355, %vm353
      %vm358 = vmand %vm356, %vm354
      %v359 = vadd.s32 %v345, 16
      %v360 = vadd.s32 %v352, 16
      %v361 = vsel %vm357, %v359, %v345
      %v362 = vsel %vm358, %v360, %v352
      %vm363 = vcmp.ne.s32.totalorder %v361, 0
      %vm364 = vcmp.ne.s32.totalorder %v362, 0
      %vm365 = vcmp.ne.s32.totalorder %v361, 15
      %vm366 = vcmp.ne.s32.totalorder %v362, 15
      %367 = vst [vmem:[#allocation2] sm:$0xf] 0.0
      %368 = vst [vmem:[#allocation2 + $0xc] sm:$0xf] 0.0
      %369 = vst [vmem:[#allocation3] sm:$0xff] 0.0
      %370 = vst [vmem:[#allocation3 + $0x18] sm:$0xff] 0.0
      %371 = vst [vmem:[#allocation4] sm:$0xff] 0.0
      %372 = vst [vmem:[#allocation4 + $0x20] sm:$0xff] 0.0
      %373 = vst [vmem:[#allocation4 + $0x18] sm:$0xff] 0.0
      %374 = vst [vmem:[#allocation4 + $0x38] sm:$0xff] 0.0
      %v375 = vld [vmem:[%s330] sm:$0xff]
      %376 = vst [vmem:[#allocation2 + $0x4] sm:$0xff] %v375
      %v377 = vld [vmem:[#allocation2] sm:$0xff]
      %v378 = vld [vmem:[#allocation2 + $0x8] sm:$0xf]
      %v379 = vsel %vm363, 1, 0
      %v380 = vsel %vm364, 1, 0
      %vm381 = vcmp.eq.s32.totalorder %v379, 1
      %vm382 = vcmp.eq.s32.totalorder %v380, 1
      %v385 = vcombine.high %v377, %v377
      %386 = vrot.lane.b32.xlu0 %v377, 17
      %v387 = vpop.permute.xlu0 %386
      %388 = vrot.lane.b32.xlu0 %v385, 17
      %v389 = vpop.permute.xlu0 %388
      %390 = vrot.lane.b32.xlu0 %v378, 17
      %v391 = vpop.permute.xlu0 %390
      %vm392 = vcmask 138240
      %v393 = vsel %vm392, %v387, %v389
      %v394 = vsel %vm392, %v389, %v391
      %v397 = vsel %vm381, %v393, 0.0
      %v398 = vsel %vm382, %v394, 0.0
      %399 = vst [vmem:[#allocation5] sm:$0xf] %v397
      %400 = vst [vmem:[#allocation5 + $0x8] sm:$0xf] %v398
      %v401 = vld [vmem:[#allocation2] sm:$0xff]
      %v402 = vld [vmem:[#allocation2 + $0x8] sm:$0xf]
      %v405 = vcombine.low %v401, %v401
      %v406 = vcombine.low %v402, %v402
      %407 = vrot.lane.b32.xlu0 %v405, 16
      %v408 = vpop.permute.xlu0 %407
      %409 = vrot.lane.b32.xlu0 %v401, 16
      %v410 = vpop.permute.xlu0 %409
      %411 = vrot.lane.b32.xlu0 %v406, 16
      %v412 = vpop.permute.xlu0 %411
      %vm413 = vcmask 130048
      %v414 = vsel %vm413, %v408, %v410
      %v415 = vsel %vm413, %v410, %v412
      %418 = vst [vmem:[#allocation5] sm:$0xf0] %v414
      %419 = vst [vmem:[#allocation5 + $0x8] sm:$0xf0] %v415
      %v420 = vld [vmem:[#allocation2] sm:$0xff]
      %v421 = vld [vmem:[#allocation2 + $0x8] sm:$0xf]
      %v422 = vsel %vm365, 1, 0
      %v423 = vsel %vm366, 1, 0
      %vm424 = vcmp.eq.s32.totalorder %v422, 1
      %vm425 = vcmp.eq.s32.totalorder %v423, 1
      %v428 = vcombine.high %v420, %v420
      %429 = vrot.lane.b32.xlu0 %v420, 15
      %v430 = vpop.permute.xlu0 %429
      %431 = vrot.lane.b32.xlu0 %v428, 15
      %v432 = vpop.permute.xlu0 %431
      %433 = vrot.lane.b32.xlu0 %v421, 15
      %v434 = vpop.permute.xlu0 %433
      %vm435 = vcmask 121856
      %v436 = vsel %vm435, %v430, %v432
      %v437 = vsel %vm435, %v432, %v434
      %v440 = vsel %vm424, %v436, 0.0
      %v441 = vsel %vm425, %v437, 0.0
      %442 = vst [vmem:[#allocation5 + $0x10] sm:$0xf] %v440
      %443 = vst [vmem:[#allocation5 + $0x18] sm:$0xf] %v441
      %v444 = vld [vmem:[#allocation2] sm:$0xff]
      %v445 = vld [vmem:[#allocation2 + $0x8] sm:$0xf]
      %v448 = vcombine.high %v444, %v444
      %449 = vrot.lane.b32.xlu0 %v444, 1
      %v450 = vpop.permute.xlu0 %449
      %451 = vrot.lane.b32.xlu0 %v448, 1
      %v452 = vpop.permute.xlu0 %451
      %453 = vrot.lane.b32.xlu0 %v445, 1
      %v454 = vpop.permute.xlu0 %453
      %vm455 = vcmask 7168
      %v456 = vsel %vm455, %v450, %v452
      %v457 = vsel %vm455, %v452, %v454
      %v460 = vsel %vm381, %v456, 0.0
      %v461 = vsel %vm382, %v457, 0.0
      %v464 = vrot.slane %v460, 4
      %v465 = vrot.slane %v461, 4
      %468 = vst [vmem:[#allocation5 + $0x10] sm:$0xf0] %v464
      %469 = vst [vmem:[#allocation5 + $0x18] sm:$0xf0] %v465
      %v470 = vld [vmem:[#allocation2 + $0x4] sm:$0xff]
      %v472 = vcombine.high %v470, %v470
      %474 = vst [vmem:[#allocation5 + $0x20] sm:$0xf] %v470
      %475 = vst [vmem:[#allocation5 + $0x28] sm:$0xf] %v472
      %v476 = vld [vmem:[#allocation2 + $0x4] sm:$0xff]
      %v477 = vld [vmem:[#allocation2 + $0xc] sm:$0xf]
      %v480 = vcombine.high %v476, %v476
      %481 = vrot.lane.b32.xlu0 %v476, 127
      %v482 = vpop.permute.xlu0 %481
      %483 = vrot.lane.b32.xlu0 %v480, 127
      %v484 = vpop.permute.xlu0 %483
      %485 = vrot.lane.b32.xlu0 %v477, 127
      %v486 = vpop.permute.xlu0 %485
      %vm487 = vcmask 1039360
      %v488 = vsel %vm487, %v482, %v484
      %v489 = vsel %vm487, %v484, %v486
      %v492 = vsel %vm424, %v488, 0.0
      %v493 = vsel %vm425, %v489, 0.0
      %v496 = vrot.slane %v492, 4
      %v497 = vrot.slane %v493, 4
      %500 = vst [vmem:[#allocation5 + $0x20] sm:$0xf0] %v496
      %501 = vst [vmem:[#allocation5 + $0x28] sm:$0xf0] %v497
      %v502 = vld [vmem:[#allocation2 + $0x4] sm:$0xff]
      %v503 = vld [vmem:[#allocation2 + $0xc] sm:$0xf]
      %v506 = vcombine.high %v502, %v502
      %507 = vrot.lane.b32.xlu0 %v502, 113
      %v508 = vpop.permute.xlu0 %507
      %509 = vrot.lane.b32.xlu0 %v506, 113
      %v510 = vpop.permute.xlu0 %509
      %511 = vrot.lane.b32.xlu0 %v503, 113
      %v512 = vpop.permute.xlu0 %511
      %vm513 = vcmask 924672
      %v514 = vsel %vm513, %v508, %v510
      %v515 = vsel %vm513, %v510, %v512
      %v518 = vsel %vm381, %v514, 0.0
      %v519 = vsel %vm382, %v515, 0.0
      %520 = vst [vmem:[#allocation5 + $0x30] sm:$0xf] %v518
      %521 = vst [vmem:[#allocation5 + $0x38] sm:$0xf] %v519
      %v522 = vld [vmem:[#allocation2 + $0x4] sm:$0xff]
      %v523 = vld [vmem:[#allocation2 + $0xc] sm:$0xf]
      %v526 = vcombine.low %v522, %v522
      %v527 = vcombine.low %v523, %v523
      %528 = vrot.lane.b32.xlu0 %v526, 112
      %v529 = vpop.permute.xlu0 %528
      %530 = vrot.lane.b32.xlu0 %v522, 112
      %v531 = vpop.permute.xlu0 %530
      %532 = vrot.lane.b32.xlu0 %v527, 112
      %v533 = vpop.permute.xlu0 %532
      %vm534 = vcmask 916480
      %v535 = vsel %vm534, %v529, %v531
      %v536 = vsel %vm534, %v531, %v533
      %539 = vst [vmem:[#allocation5 + $0x30] sm:$0xf0] %v535
      %540 = vst [vmem:[#allocation5 + $0x38] sm:$0xf0] %v536
      %v541 = vld [vmem:[#allocation2 + $0x4] sm:$0xff]
      %v542 = vld [vmem:[#allocation2 + $0xc] sm:$0xf]
      %v545 = vcombine.high %v541, %v541
      %546 = vrot.lane.b32.xlu0 %v541, 111
      %v547 = vpop.permute.xlu0 %546
      %548 = vrot.lane.b32.xlu0 %v545, 111
      %v549 = vpop.permute.xlu0 %548
      %550 = vrot.lane.b32.xlu0 %v542, 111
      %v551 = vpop.permute.xlu0 %550
      %vm552 = vcmask 908288
      %v553 = vsel %vm552, %v547, %v549
      %v554 = vsel %vm552, %v549, %v551
      %v557 = vsel %vm424, %v553, 0.0
      %v558 = vsel %vm425, %v554, 0.0
      %559 = vst [vmem:[#allocation5 + $0x40] sm:$0xf] %v557
      %560 = vst [vmem:[#allocation5 + $0x48] sm:$0xf] %v558
      %v561 = vld [vmem:[%s1] sm:$0xff]
      %v562 = vld [vmem:[#allocation5] sm:$0xff]
      %v563 = vld [vmem:[#allocation5 + $0x8] sm:$0xff]
      %v564 = vld [vmem:[#allocation5 + $0x10] sm:$0xff]
      %v565 = vld [vmem:[#allocation5 + $0x18] sm:$0xff]
      %v566 = vld [vmem:[#allocation5 + $0x20] sm:$0xff]
      %v567 = vld [vmem:[#allocation5 + $0x28] sm:$0xff]
      %v568 = vld [vmem:[#allocation5 + $0x30] sm:$0xff]
      %v569 = vld [vmem:[#allocation5 + $0x38] sm:$0xff]
      %v570 = vld [vmem:[#allocation5 + $0x40] sm:$0xf]
      %v571 = vld [vmem:[#allocation5 + $0x48] sm:$0xf]
      %vm572 = vcmask 293888
      %v574 = vsel %vm572, %v561, 0
      %vm576 = vcmask 1043456
      %v578 = vsel %vm576, %v570, 0
      %v581 = vsel %vm576, %v571, 0
      %583 = vmatprep.subr.mxu0 %v563
      %584 = vmatpush1.msra.mxu0 %v562
      %585 = vmatprep.subr.mxu0 %v565
      %586 = vmatpush1.msra.mxu0 %v564
      %587 = vmatprep.subr.mxu0 %v567
      %588 = vmatpush1.msra.mxu0 %v566
      %589 = vmatprep.subr.mxu0 %v569
      %590 = vmatpush1.msra.mxu0 %v568
      %591 = vmatprep.subr.mxu0 %v581
      %592 = vmatpush1.msra.mxu0 %v578
      %593 = vmatprep.subr.mxu0 0.0
      %594 = vmatpush1.msra.mxu0 0.0
      %595 = vmatprep.subr.mxu0 0.0
      %596 = vmatpush1.msra.mxu0 0.0
      %597 = vmatprep.subr.mxu0 0.0
      %598 = vmatpush1.msra.mxu0 0.0
      %599 = vmatprep.subr.mxu0 0.0
      %600 = vmatpush1.msra.mxu0 0.0
      %601 = vmatprep.subr.mxu0 0.0
      %602 = vmatpush1.msra.mxu0 0.0
      %603 = vmatprep.subr.mxu0 0.0
      %604 = vmatpush1.msra.mxu0 0.0
      %605 = vmatprep.subr.mxu0 0.0
      %606 = vmatpush1.msra.mxu0 0.0
      %607 = vmatprep.subr.mxu0 0.0
      %608 = vmatpush1.msra.mxu0 0.0
      %609 = vmatprep.subr.mxu0 0.0
      %610 = vmatpush1.msra.mxu0 0.0
      %611 = vmatprep.subr.mxu0 0.0
      %612 = vmatpush1.msra.mxu0 0.0
      %613 = vmatprep.subr.mxu0 0.0
      %614 = vmatpush1.msra.mxu0 0.0
      %615 = vmatprep.subr.mxu0 0.0
      %616 = vmatpush1.msra.mxu0 0.0
      %617 = vmatprep.subr.mxu0 0.0
      %618 = vmatpush1.msra.mxu0 0.0
      %619 = vmatprep.subr.mxu0 0.0
      %620 = vmatpush1.msra.mxu0 0.0
      %621 = vmatprep.subr.mxu0 0.0
      %622 = vmatpush1.msra.mxu0 0.0
      %623 = vmatprep.subr.mxu0 0.0
      %624 = vmatpush1.msra.mxu0 0.0
      %625 = vmatprep.subr.mxu0 0.0
      %626 = vmatpush1.msra.mxu0 0.0
      %627 = vmatprep.subr.mxu0 0.0
      %628 = vmatpush1.msra.mxu0 0.0
      %629 = vmatprep.subr.mxu0 0.0
      %630 = vmatpush1.msra.mxu0 0.0
      %631 = vmatprep.subr.mxu0 0.0
      %632 = vmatpush1.msra.mxu0 0.0
      %633 = vmatprep.subr.mxu0 0.0
      %634 = vmatpush1.msra.mxu0 0.0
      %635 = vmatprep.subr.mxu0 0.0
      %636 = vmatpush1.msra.mxu0 0.0
      %637 = vmatprep.subr.mxu0 0.0
      %638 = vmatpush1.msra.mxu0 0.0
      %639 = vmatprep.subr.mxu0 0.0
      %640 = vmatpush1.msra.mxu0 0.0
      %641 = vmatprep.subr.mxu0 0.0
      %642 = vmatpush1.msra.mxu0 0.0
      %643 = vmatprep.subr.mxu0 0.0
      %644 = vmatpush1.msra.mxu0 0.0
      %645 = vmatprep.subr.mxu0 0.0
      %646 = vmatpush1.msra.mxu0 0.0
      %647 = vmatprep.mubr.f32.mxu0 0.0
      %648 = vmatmul.mubr.f32.gmra.mrb[0].mxu0 %v574
      %v649 = vpop.f32.mrb[0].mxu0
      %v650 = vadd.f32 0.0, %v649
      %v651 = vpop.f32.mrb[0].mxu0
      %v652 = vadd.f32 0.0, %v651
      %653 = vdwg.mxu0
      %s654 = sld [smem:[#allocation8]]
      %vm655 = vcmp.ge.f32.partialorder %v650, 0.0
      %vm656 = vcmp.ge.f32.partialorder %v652, 0.0
      %v657 = vstv %s654
      %v658 = vmul.f32 %v657, %v650
      %v659 = vmul.f32 %v657, %v652
      %v660 = vsel %vm655, %v650, %v658
      %v661 = vsel %vm656, %v652, %v659
      %662 = vst [vmem:[#allocation3 + $0x8] sm:$0xff] %v660
      %663 = vst [vmem:[#allocation3 + $0x10] sm:$0xff] %v661
      %v664 = vld [vmem:[#allocation3] sm:$0xff]
      %v665 = vld [vmem:[#allocation3 + $0x8] sm:$0xff]
      %v666 = vld [vmem:[#allocation3 + $0x10] sm:$0xff]
      %670 = vrot.lane.b32.xlu0 %v664, 17
      %v671 = vpop.permute.xlu0 %670
      %672 = vrot.lane.b32.xlu0 %v665, 17
      %v673 = vpop.permute.xlu0 %672
      %674 = vrot.lane.b32.xlu0 %v666, 17
      %v675 = vpop.permute.xlu0 %674
      %v676 = vsel %vm392, %v671, %v673
      %v677 = vsel %vm392, %v673, %v675
      %v680 = vsel %vm381, %v676, 0.0
      %v681 = vsel %vm382, %v677, 0.0
      %682 = vst [vmem:[#allocation6] sm:$0xff] %v680
      %683 = vst [vmem:[#allocation6 + $0x8] sm:$0xff] %v681
      %v684 = vld [vmem:[#allocation3] sm:$0xff]
      %v685 = vld [vmem:[#allocation3 + $0x8] sm:$0xff]
      %v686 = vld [vmem:[#allocation3 + $0x10] sm:$0xff]
      %690 = vrot.lane.b32.xlu0 %v684, 16
      %v691 = vpop.permute.xlu0 %690
      %692 = vrot.lane.b32.xlu0 %v685, 16
      %v693 = vpop.permute.xlu0 %692
      %694 = vrot.lane.b32.xlu0 %v686, 16
      %v695 = vpop.permute.xlu0 %694
      %v696 = vsel %vm413, %v691, %v693
      %v697 = vsel %vm413, %v693, %v695
      %700 = vst [vmem:[#allocation6 + $0x10] sm:$0xff] %v696
      %701 = vst [vmem:[#allocation6 + $0x18] sm:$0xff] %v697
      %v702 = vld [vmem:[#allocation3] sm:$0xff]
      %v703 = vld [vmem:[#allocation3 + $0x8] sm:$0xff]
      %v704 = vld [vmem:[#allocation3 + $0x10] sm:$0xff]
      %708 = vrot.lane.b32.xlu0 %v702, 15
      %v709 = vpop.permute.xlu0 %708
      %710 = vrot.lane.b32.xlu0 %v703, 15
      %v711 = vpop.permute.xlu0 %710
      %712 = vrot.lane.b32.xlu0 %v704, 15
      %v713 = vpop.permute.xlu0 %712
      %v714 = vsel %vm435, %v709, %v711
      %v715 = vsel %vm435, %v711, %v713
      %v718 = vsel %vm424, %v714, 0.0
      %v719 = vsel %vm425, %v715, 0.0
      %720 = vst [vmem:[#allocation6 + $0x20] sm:$0xff] %v718
      %721 = vst [vmem:[#allocation6 + $0x28] sm:$0xff] %v719
      %v722 = vld [vmem:[#allocation3] sm:$0xff]
      %v723 = vld [vmem:[#allocation3 + $0x8] sm:$0xff]
      %v724 = vld [vmem:[#allocation3 + $0x10] sm:$0xff]
      %728 = vrot.lane.b32.xlu0 %v722, 1
      %v729 = vpop.permute.xlu0 %728
      %730 = vrot.lane.b32.xlu0 %v723, 1
      %v731 = vpop.permute.xlu0 %730
      %732 = vrot.lane.b32.xlu0 %v724, 1
      %v733 = vpop.permute.xlu0 %732
      %v734 = vsel %vm455, %v729, %v731
      %v735 = vsel %vm455, %v731, %v733
      %v738 = vsel %vm381, %v734, 0.0
      %v739 = vsel %vm382, %v735, 0.0
      %740 = vst [vmem:[#allocation6 + $0x30] sm:$0xff] %v738
      %741 = vst [vmem:[#allocation6 + $0x38] sm:$0xff] %v739
      %v742 = vld [vmem:[#allocation3 + $0x8] sm:$0xff]
      %v743 = vld [vmem:[#allocation3 + $0x10] sm:$0xff]
      %744 = vst [vmem:[#allocation6 + $0x40] sm:$0xff] %v742
      %745 = vst [vmem:[#allocation6 + $0x48] sm:$0xff] %v743
      %v746 = vld [vmem:[#allocation3 + $0x8] sm:$0xff]
      %v747 = vld [vmem:[#allocation3 + $0x10] sm:$0xff]
      %v748 = vld [vmem:[#allocation3 + $0x18] sm:$0xff]
      %752 = vrot.lane.b32.xlu0 %v746, 127
      %v753 = vpop.permute.xlu0 %752
      %754 = vrot.lane.b32.xlu0 %v747, 127
      %v755 = vpop.permute.xlu0 %754
      %756 = vrot.lane.b32.xlu0 %v748, 127
      %v757 = vpop.permute.xlu0 %756
      %v758 = vsel %vm487, %v753, %v755
      %v759 = vsel %vm487, %v755, %v757
      %v762 = vsel %vm424, %v758, 0.0
      %v763 = vsel %vm425, %v759, 0.0
      %764 = vst [vmem:[#allocation6 + $0x50] sm:$0xff] %v762
      %765 = vst [vmem:[#allocation6 + $0x58] sm:$0xff] %v763
      %v766 = vld [vmem:[#allocation3 + $0x8] sm:$0xff]
      %v767 = vld [vmem:[#allocation3 + $0x10] sm:$0xff]
      %v768 = vld [vmem:[#allocation3 + $0x18] sm:$0xff]
      %772 = vrot.lane.b32.xlu0 %v766, 113
      %v773 = vpop.permute.xlu0 %772
      %774 = vrot.lane.b32.xlu0 %v767, 113
      %v775 = vpop.permute.xlu0 %774
      %776 = vrot.lane.b32.xlu0 %v768, 113
      %v777 = vpop.permute.xlu0 %776
      %v778 = vsel %vm513, %v773, %v775
      %v779 = vsel %vm513, %v775, %v777
      %v782 = vsel %vm381, %v778, 0.0
      %v783 = vsel %vm382, %v779, 0.0
      %784 = vst [vmem:[#allocation6 + $0x60] sm:$0xff] %v782
      %785 = vst [vmem:[#allocation6 + $0x68] sm:$0xff] %v783
      %v786 = vld [vmem:[#allocation3 + $0x8] sm:$0xff]
      %v787 = vld [vmem:[#allocation3 + $0x10] sm:$0xff]
      %v788 = vld [vmem:[#allocation3 + $0x18] sm:$0xff]
      %792 = vrot.lane.b32.xlu0 %v786, 112
      %v793 = vpop.permute.xlu0 %792
      %794 = vrot.lane.b32.xlu0 %v787, 112
      %v795 = vpop.permute.xlu0 %794
      %796 = vrot.lane.b32.xlu0 %v788, 112
      %v797 = vpop.permute.xlu0 %796
      %v798 = vsel %vm534, %v793, %v795
      %v799 = vsel %vm534, %v795, %v797
      %802 = vst [vmem:[#allocation6 + $0x70] sm:$0xff] %v798
      %803 = vst [vmem:[#allocation6 + $0x78] sm:$0xff] %v799
      %v804 = vld [vmem:[#allocation3 + $0x8] sm:$0xff]
      %v805 = vld [vmem:[#allocation3 + $0x10] sm:$0xff]
      %v806 = vld [vmem:[#allocation3 + $0x18] sm:$0xff]
      %810 = vrot.lane.b32.xlu0 %v804, 111
      %v811 = vpop.permute.xlu0 %810
      %812 = vrot.lane.b32.xlu0 %v805, 111
      %v813 = vpop.permute.xlu0 %812
      %814 = vrot.lane.b32.xlu0 %v806, 111
      %v815 = vpop.permute.xlu0 %814
      %v816 = vsel %vm552, %v811, %v813
      %v817 = vsel %vm552, %v813, %v815
      %v820 = vsel %vm424, %v816, 0.0
      %v821 = vsel %vm425, %v817, 0.0
      %822 = vst [vmem:[#allocation6 + $0x80] sm:$0xff] %v820
      %823 = vst [vmem:[#allocation6 + $0x88] sm:$0xff] %v821
      %v824 = vld [vmem:[%s3] sm:$0xff]
      %v825 = vld [vmem:[%s3 + $0x8] sm:$0xff]
      %v826 = vld [vmem:[#allocation6] sm:$0xff]
      %v827 = vld [vmem:[#allocation6 + $0x8] sm:$0xff]
      %v828 = vld [vmem:[#allocation6 + $0x10] sm:$0xff]
      %v829 = vld [vmem:[#allocation6 + $0x18] sm:$0xff]
      %v830 = vld [vmem:[#allocation6 + $0x20] sm:$0xff]
      %v831 = vld [vmem:[#allocation6 + $0x28] sm:$0xff]
      %v832 = vld [vmem:[#allocation6 + $0x30] sm:$0xff]
      %v833 = vld [vmem:[#allocation6 + $0x38] sm:$0xff]
      %v834 = vld [vmem:[#allocation6 + $0x40] sm:$0xff]
      %v835 = vld [vmem:[#allocation6 + $0x48] sm:$0xff]
      %v836 = vld [vmem:[#allocation6 + $0x50] sm:$0xff]
      %v837 = vld [vmem:[#allocation6 + $0x58] sm:$0xff]
      %v838 = vld [vmem:[#allocation6 + $0x60] sm:$0xff]
      %v839 = vld [vmem:[#allocation6 + $0x68] sm:$0xff]
      %v840 = vld [vmem:[#allocation6 + $0x70] sm:$0xff]
      %v841 = vld [vmem:[#allocation6 + $0x78] sm:$0xff]
      %v842 = vld [vmem:[#allocation6 + $0x80] sm:$0xff]
      %v843 = vld [vmem:[#allocation6 + $0x88] sm:$0xff]
      %v844 = vld [vmem:[%s4] sm:$0xff]
      %v845 = vld [vmem:[%s4 + $0x8] sm:$0xff]
      %847 = vset.pattern.permute.xlu0 0
      %848 = vperm.xlu0 %847, %v844
      %v849 = vpop.permute.xlu0 %848
      %852 = vset.pattern.permute.xlu0 0
      %853 = vperm.xlu0 %852, %v845
      %v854 = vpop.permute.xlu0 %853
      %vm856 = vcmask 588800
      %v858 = vsel %vm856, %v824, 0
      %v861 = vsel %vm856, %v825, 0
      %863 = vmatprep.subr.mxu0 %v827
      %864 = vmatpush1.msra.mxu0 %v826
      %865 = vmatprep.subr.mxu0 %v829
      %866 = vmatpush1.msra.mxu0 %v828
      %867 = vmatprep.subr.mxu0 %v831
      %868 = vmatpush1.msra.mxu0 %v830
      %869 = vmatprep.subr.mxu0 %v833
      %870 = vmatpush1.msra.mxu0 %v832
      %871 = vmatprep.subr.mxu0 %v835
      %872 = vmatpush1.msra.mxu0 %v834
      %873 = vmatprep.subr.mxu0 %v837
      %874 = vmatpush1.msra.mxu0 %v836
      %875 = vmatprep.subr.mxu0 %v839
      %876 = vmatpush1.msra.mxu0 %v838
      %877 = vmatprep.subr.mxu0 %v841
      %878 = vmatpush1.msra.mxu0 %v840
      %879 = vmatprep.subr.mxu0 %v843
      %880 = vmatpush1.msra.mxu0 %v842
      %881 = vmatprep.subr.mxu0 0.0
      %882 = vmatpush1.msra.mxu0 0.0
      %883 = vmatprep.subr.mxu0 0.0
      %884 = vmatpush1.msra.mxu0 0.0
      %885 = vmatprep.subr.mxu0 0.0
      %886 = vmatpush1.msra.mxu0 0.0
      %887 = vmatprep.subr.mxu0 0.0
      %888 = vmatpush1.msra.mxu0 0.0
      %889 = vmatprep.subr.mxu0 0.0
      %890 = vmatpush1.msra.mxu0 0.0
      %891 = vmatprep.subr.mxu0 0.0
      %892 = vmatpush1.msra.mxu0 0.0
      %893 = vmatprep.subr.mxu0 0.0
      %894 = vmatpush1.msra.mxu0 0.0
      %895 = vmatprep.subr.mxu0 0.0
      %896 = vmatpush1.msra.mxu0 0.0
      %897 = vmatprep.subr.mxu0 0.0
      %898 = vmatpush1.msra.mxu0 0.0
      %899 = vmatprep.subr.mxu0 0.0
      %900 = vmatpush1.msra.mxu0 0.0
      %901 = vmatprep.subr.mxu0 0.0
      %902 = vmatpush1.msra.mxu0 0.0
      %903 = vmatprep.subr.mxu0 0.0
      %904 = vmatpush1.msra.mxu0 0.0
      %905 = vmatprep.subr.mxu0 0.0
      %906 = vmatpush1.msra.mxu0 0.0
      %907 = vmatprep.subr.mxu0 0.0
      %908 = vmatpush1.msra.mxu0 0.0
      %909 = vmatprep.subr.mxu0 0.0
      %910 = vmatpush1.msra.mxu0 0.0
      %911 = vmatprep.subr.mxu0 0.0
      %912 = vmatpush1.msra.mxu0 0.0
      %913 = vmatprep.subr.mxu0 0.0
      %914 = vmatpush1.msra.mxu0 0.0
      %915 = vmatprep.subr.mxu0 0.0
      %916 = vmatpush1.msra.mxu0 0.0
      %917 = vmatprep.subr.mxu0 0.0
      %918 = vmatpush1.msra.mxu0 0.0
      %919 = vmatprep.subr.mxu0 0.0
      %920 = vmatpush1.msra.mxu0 0.0
      %921 = vmatprep.subr.mxu0 0.0
      %922 = vmatpush1.msra.mxu0 0.0
      %923 = vmatprep.subr.mxu0 0.0
      %924 = vmatpush1.msra.mxu0 0.0
      %925 = vmatprep.subr.mxu0 0.0
      %926 = vmatpush1.msra.mxu0 0.0
      %927 = vmatprep.mubr.f32.mxu0 0.0
      %928 = vmatmul.mubr.f32.gmra.mrb[0].mxu0 %v858
      %v929 = vpop.f32.mrb[0].mxu0
      %v930 = vadd.f32 %v849, %v929
      %v931 = vpop.f32.mrb[0].mxu0
      %v932 = vadd.f32 %v849, %v931
      %933 = vmatprep.mubr.f32.mxu0 0.0
      %934 = vmatmul.mubr.f32.gmra.mrb[0].mxu0 %v861
      %v935 = vpop.f32.mrb[0].mxu0
      %v936 = vadd.f32 %v854, %v935
      %v937 = vpop.f32.mrb[0].mxu0
      %v938 = vadd.f32 %v854, %v937
      %939 = vdwg.mxu0
      %s940 = sld [smem:[#allocation9]]
      %vm941 = vcmp.ge.f32.partialorder %v930, 0.0
      %vm942 = vcmp.ge.f32.partialorder %v932, 0.0
      %vm943 = vcmp.ge.f32.partialorder %v936, 0.0
      %vm944 = vcmp.ge.f32.partialorder %v938, 0.0
      %v945 = vstv %s940
      %v946 = vmul.f32 %v945, %v930
      %v947 = vmul.f32 %v945, %v932
      %v948 = vmul.f32 %v945, %v936
      %v949 = vmul.f32 %v945, %v938
      %v950 = vsel %vm941, %v930, %v946
      %v951 = vsel %vm942, %v932, %v947
      %v952 = vsel %vm943, %v936, %v948
      %v953 = vsel %vm944, %v938, %v949
      %954 = vst [vmem:[#allocation4 + $0x8] sm:$0xff] %v950
      %955 = vst [vmem:[#allocation4 + $0x10] sm:$0xff] %v951
      %956 = vst [vmem:[#allocation4 + $0x28] sm:$0xff] %v952
      %957 = vst [vmem:[#allocation4 + $0x30] sm:$0xff] %v953
      %v958 = vld [vmem:[#allocation4] sm:$0xff]
      %v959 = vld [vmem:[#allocation4 + $0x8] sm:$0xff]
      %v960 = vld [vmem:[#allocation4 + $0x10] sm:$0xff]
      %v961 = vld [vmem:[#allocation4 + $0x20] sm:$0xff]
      %v962 = vld [vmem:[#allocation4 + $0x28] sm:$0xff]
      %v963 = vld [vmem:[#allocation4 + $0x30] sm:$0xff]
      %970 = vrot.lane.b32.xlu0 %v958, 17
      %v971 = vpop.permute.xlu0 %970
      %972 = vrot.lane.b32.xlu0 %v959, 17
      %v973 = vpop.permute.xlu0 %972
      %974 = vrot.lane.b32.xlu0 %v960, 17
      %v975 = vpop.permute.xlu0 %974
      %976 = vrot.lane.b32.xlu0 %v961, 17
      %v977 = vpop.permute.xlu0 %976
      %978 = vrot.lane.b32.xlu0 %v962, 17
      %v979 = vpop.permute.xlu0 %978
      %980 = vrot.lane.b32.xlu0 %v963, 17
      %v981 = vpop.permute.xlu0 %980
      %v982 = vsel %vm392, %v971, %v973
      %v983 = vsel %vm392, %v973, %v975
      %v984 = vsel %vm392, %v977, %v979
      %v985 = vsel %vm392, %v979, %v981
      %v990 = vsel %vm381, %v982, 0.0
      %v991 = vsel %vm382, %v983, 0.0
      %v992 = vsel %vm381, %v984, 0.0
      %v993 = vsel %vm382, %v985, 0.0
      %994 = vst [vmem:[#allocation7] sm:$0xff] %v990
      %995 = vst [vmem:[#allocation7 + $0x8] sm:$0xff] %v991
      %996 = vst [vmem:[#allocation7 + $0x10] sm:$0xff] %v992
      %997 = vst [vmem:[#allocation7 + $0x18] sm:$0xff] %v993
      %v998 = vld [vmem:[#allocation4] sm:$0xff]
      %v999 = vld [vmem:[#allocation4 + $0x8] sm:$0xff]
      %v1000 = vld [vmem:[#allocation4 + $0x10] sm:$0xff]
      %v1001 = vld [vmem:[#allocation4 + $0x20] sm:$0xff]
      %v1002 = vld [vmem:[#allocation4 + $0x28] sm:$0xff]
      %v1003 = vld [vmem:[#allocation4 + $0x30] sm:$0xff]
      %1010 = vrot.lane.b32.xlu0 %v998, 16
      %v1011 = vpop.permute.xlu0 %1010
      %1012 = vrot.lane.b32.xlu0 %v999, 16
      %v1013 = vpop.permute.xlu0 %1012
      %1014 = vrot.lane.b32.xlu0 %v1000, 16
      %v1015 = vpop.permute.xlu0 %1014
      %1016 = vrot.lane.b32.xlu0 %v1001, 16
      %v1017 = vpop.permute.xlu0 %1016
      %1018 = vrot.lane.b32.xlu0 %v1002, 16
      %v1019 = vpop.permute.xlu0 %1018
      %1020 = vrot.lane.b32.xlu0 %v1003, 16
      %v1021 = vpop.permute.xlu0 %1020
      %v1022 = vsel %vm413, %v1011, %v1013
      %v1023 = vsel %vm413, %v1013, %v1015
      %v1024 = vsel %vm413, %v1017, %v1019
      %v1025 = vsel %vm413, %v1019, %v1021
      %1030 = vst [vmem:[#allocation7 + $0x20] sm:$0xff] %v1022
      %1031 = vst [vmem:[#allocation7 + $0x28] sm:$0xff] %v1023
      %1032 = vst [vmem:[#allocation7 + $0x30] sm:$0xff] %v1024
      %1033 = vst [vmem:[#allocation7 + $0x38] sm:$0xff] %v1025
      %v1034 = vld [vmem:[#allocation4] sm:$0xff]
      %v1035 = vld [vmem:[#allocation4 + $0x8] sm:$0xff]
      %v1036 = vld [vmem:[#allocation4 + $0x10] sm:$0xff]
      %v1037 = vld [vmem:[#allocation4 + $0x20] sm:$0xff]
      %v1038 = vld [vmem:[#allocation4 + $0x28] sm:$0xff]
      %v1039 = vld [vmem:[#allocation4 + $0x30] sm:$0xff]
      %1046 = vrot.lane.b32.xlu0 %v1034, 15
      %v1047 = vpop.permute.xlu0 %1046
      %1048 = vrot.lane.b32.xlu0 %v1035, 15
      %v1049 = vpop.permute.xlu0 %1048
      %1050 = vrot.lane.b32.xlu0 %v1036, 15
      %v1051 = vpop.permute.xlu0 %1050
      %1052 = vrot.lane.b32.xlu0 %v1037, 15
      %v1053 = vpop.permute.xlu0 %1052
      %1054 = vrot.lane.b32.xlu0 %v1038, 15
      %v1055 = vpop.permute.xlu0 %1054
      %1056 = vrot.lane.b32.xlu0 %v1039, 15
      %v1057 = vpop.permute.xlu0 %1056
      %v1058 = vsel %vm435, %v1047, %v1049
      %v1059 = vsel %vm435, %v1049, %v1051
      %v1060 = vsel %vm435, %v1053, %v1055
      %v1061 = vsel %vm435, %v1055, %v1057
      %v1066 = vsel %vm424, %v1058, 0.0
      %v1067 = vsel %vm425, %v1059, 0.0
      %v1068 = vsel %vm424, %v1060, 0.0
      %v1069 = vsel %vm425, %v1061, 0.0
      %1070 = vst [vmem:[#allocation7 + $0x40] sm:$0xff] %v1066
      %1071 = vst [vmem:[#allocation7 + $0x48] sm:$0xff] %v1067
      %1072 = vst [vmem:[#allocation7 + $0x50] sm:$0xff] %v1068
      %1073 = vst [vmem:[#allocation7 + $0x58] sm:$0xff] %v1069
      %v1074 = vld [vmem:[#allocation4] sm:$0xff]
      %v1075 = vld [vmem:[#allocation4 + $0x8] sm:$0xff]
      %v1076 = vld [vmem:[#allocation4 + $0x10] sm:$0xff]
      %v1077 = vld [vmem:[#allocation4 + $0x20] sm:$0xff]
      %v1078 = vld [vmem:[#allocation4 + $0x28] sm:$0xff]
      %v1079 = vld [vmem:[#allocation4 + $0x30] sm:$0xff]
      %1086 = vrot.lane.b32.xlu0 %v1074, 1
      %v1087 = vpop.permute.xlu0 %1086
      %1088 = vrot.lane.b32.xlu0 %v1075, 1
      %v1089 = vpop.permute.xlu0 %1088
      %1090 = vrot.lane.b32.xlu0 %v1076, 1
      %v1091 = vpop.permute.xlu0 %1090
      %1092 = vrot.lane.b32.xlu0 %v1077, 1
      %v1093 = vpop.permute.xlu0 %1092
      %1094 = vrot.lane.b32.xlu0 %v1078, 1
      %v1095 = vpop.permute.xlu0 %1094
      %1096 = vrot.lane.b32.xlu0 %v1079, 1
      %v1097 = vpop.permute.xlu0 %1096
      %v1098 = vsel %vm455, %v1087, %v1089
      %v1099 = vsel %vm455, %v1089, %v1091
      %v1100 = vsel %vm455, %v1093, %v1095
      %v1101 = vsel %vm455, %v1095, %v1097
      %v1106 = vsel %vm381, %v1098, 0.0
      %v1107 = vsel %vm382, %v1099, 0.0
      %v1108 = vsel %vm381, %v1100, 0.0
      %v1109 = vsel %vm382, %v1101, 0.0
      %1110 = vst [vmem:[#allocation7 + $0x60] sm:$0xff] %v1106
      %1111 = vst [vmem:[#allocation7 + $0x68] sm:$0xff] %v1107
      %1112 = vst [vmem:[#allocation7 + $0x70] sm:$0xff] %v1108
      %1113 = vst [vmem:[#allocation7 + $0x78] sm:$0xff] %v1109
      %v1114 = vld [vmem:[#allocation4 + $0x8] sm:$0xff]
      %v1115 = vld [vmem:[#allocation4 + $0x10] sm:$0xff]
      %v1116 = vld [vmem:[#allocation4 + $0x28] sm:$0xff]
      %v1117 = vld [vmem:[#allocation4 + $0x30] sm:$0xff]
      %1118 = vst [vmem:[#allocation7 + $0x80] sm:$0xff] %v1114
      %1119 = vst [vmem:[#allocation7 + $0x88] sm:$0xff] %v1115
      %1120 = vst [vmem:[#allocation7 + $0x90] sm:$0xff] %v1116
      %1121 = vst [vmem:[#allocation7 + $0x98] sm:$0xff] %v1117
      %v1122 = vld [vmem:[#allocation4 + $0x8] sm:$0xff]
      %v1123 = vld [vmem:[#allocation4 + $0x10] sm:$0xff]
      %v1124 = vld [vmem:[#allocation4 + $0x18] sm:$0xff]
      %v1125 = vld [vmem:[#allocation4 + $0x28] sm:$0xff]
      %v1126 = vld [vmem:[#allocation4 + $0x30] sm:$0xff]
      %v1127 = vld [vmem:[#allocation4 + $0x38] sm:$0xff]
      %1134 = vrot.lane.b32.xlu0 %v1122, 127
      %v1135 = vpop.permute.xlu0 %1134
      %1136 = vrot.lane.b32.xlu0 %v1123, 127
      %v1137 = vpop.permute.xlu0 %1136
      %1138 = vrot.lane.b32.xlu0 %v1124, 127
      %v1139 = vpop.permute.xlu0 %1138
      %1140 = vrot.lane.b32.xlu0 %v1125, 127
      %v1141 = vpop.permute.xlu0 %1140
      %1142 = vrot.lane.b32.xlu0 %v1126, 127
      %v1143 = vpop.permute.xlu0 %1142
      %1144 = vrot.lane.b32.xlu0 %v1127, 127
      %v1145 = vpop.permute.xlu0 %1144
      %v1146 = vsel %vm487, %v1135, %v1137
      %v1147 = vsel %vm487, %v1137, %v1139
      %v1148 = vsel %vm487, %v1141, %v1143
      %v1149 = vsel %vm487, %v1143, %v1145
      %v1154 = vsel %vm424, %v1146, 0.0
      %v1155 = vsel %vm425, %v1147, 0.0
      %v1156 = vsel %vm424, %v1148, 0.0
      %v1157 = vsel %vm425, %v1149, 0.0
      %1158 = vst [vmem:[#allocation7 + $0xa0] sm:$0xff] %v1154
      %1159 = vst [vmem:[#allocation7 + $0xa8] sm:$0xff] %v1155
      %1160 = vst [vmem:[#allocation7 + $0xb0] sm:$0xff] %v1156
      %1161 = vst [vmem:[#allocation7 + $0xb8] sm:$0xff] %v1157
      %v1162 = vld [vmem:[#allocation4 + $0x8] sm:$0xff]
      %v1163 = vld [vmem:[#allocation4 + $0x10] sm:$0xff]
      %v1164 = vld [vmem:[#allocation4 + $0x18] sm:$0xff]
      %v1165 = vld [vmem:[#allocation4 + $0x28] sm:$0xff]
      %v1166 = vld [vmem:[#allocation4 + $0x30] sm:$0xff]
      %v1167 = vld [vmem:[#allocation4 + $0x38] sm:$0xff]
      %1174 = vrot.lane.b32.xlu0 %v1162, 113
      %v1175 = vpop.permute.xlu0 %1174
      %1176 = vrot.lane.b32.xlu0 %v1163, 113
      %v1177 = vpop.permute.xlu0 %1176
      %1178 = vrot.lane.b32.xlu0 %v1164, 113
      %v1179 = vpop.permute.xlu0 %1178
      %1180 = vrot.lane.b32.xlu0 %v1165, 113
      %v1181 = vpop.permute.xlu0 %1180
      %1182 = vrot.lane.b32.xlu0 %v1166, 113
      %v1183 = vpop.permute.xlu0 %1182
      %1184 = vrot.lane.b32.xlu0 %v1167, 113
      %v1185 = vpop.permute.xlu0 %1184
      %v1186 = vsel %vm513, %v1175, %v1177
      %v1187 = vsel %vm513, %v1177, %v1179
      %v1188 = vsel %vm513, %v1181, %v1183
      %v1189 = vsel %vm513, %v1183, %v1185
      %v1194 = vsel %vm381, %v1186, 0.0
      %v1195 = vsel %vm382, %v1187, 0.0
      %v1196 = vsel %vm381, %v1188, 0.0
      %v1197 = vsel %vm382, %v1189, 0.0
      %1198 = vst [vmem:[#allocation7 + $0xc0] sm:$0xff] %v1194
      %1199 = vst [vmem:[#allocation7 + $0xc8] sm:$0xff] %v1195
      %1200 = vst [vmem:[#allocation7 + $0xd0] sm:$0xff] %v1196
      %1201 = vst [vmem:[#allocation7 + $0xd8] sm:$0xff] %v1197
      %v1202 = vld [vmem:[#allocation4 + $0x8] sm:$0xff]
      %v1203 = vld [vmem:[#allocation4 + $0x10] sm:$0xff]
      %v1204 = vld [vmem:[#allocation4 + $0x18] sm:$0xff]
      %v1205 = vld [vmem:[#allocation4 + $0x28] sm:$0xff]
      %v1206 = vld [vmem:[#allocation4 + $0x30] sm:$0xff]
      %v1207 = vld [vmem:[#allocation4 + $0x38] sm:$0xff]
      %1214 = vrot.lane.b32.xlu0 %v1202, 112
      %v1215 = vpop.permute.xlu0 %1214
      %1216 = vrot.lane.b32.xlu0 %v1203, 112
      %v1217 = vpop.permute.xlu0 %1216
      %1218 = vrot.lane.b32.xlu0 %v1204, 112
      %v1219 = vpop.permute.xlu0 %1218
      %1220 = vrot.lane.b32.xlu0 %v1205, 112
      %v1221 = vpop.permute.xlu0 %1220
      %1222 = vrot.lane.b32.xlu0 %v1206, 112
      %v1223 = vpop.permute.xlu0 %1222
      %1224 = vrot.lane.b32.xlu0 %v1207, 112
      %v1225 = vpop.permute.xlu0 %1224
      %v1226 = vsel %vm534, %v1215, %v1217
      %v1227 = vsel %vm534, %v1217, %v1219
      %v1228 = vsel %vm534, %v1221, %v1223
      %v1229 = vsel %vm534, %v1223, %v1225
      %1234 = vst [vmem:[#allocation7 + $0xe0] sm:$0xff] %v1226
      %1235 = vst [vmem:[#allocation7 + $0xe8] sm:$0xff] %v1227
      %1236 = vst [vmem:[#allocation7 + $0xf0] sm:$0xff] %v1228
      %1237 = vst [vmem:[#allocation7 + $0xf8] sm:$0xff] %v1229
      %v1238 = vld [vmem:[#allocation4 + $0x8] sm:$0xff]
      %v1239 = vld [vmem:[#allocation4 + $0x10] sm:$0xff]
      %v1240 = vld [vmem:[#allocation4 + $0x18] sm:$0xff]
      %v1241 = vld [vmem:[#allocation4 + $0x28] sm:$0xff]
      %v1242 = vld [vmem:[#allocation4 + $0x30] sm:$0xff]
      %v1243 = vld [vmem:[#allocation4 + $0x38] sm:$0xff]
      %1250 = vrot.lane.b32.xlu0 %v1238, 111
      %v1251 = vpop.permute.xlu0 %1250
      %1252 = vrot.lane.b32.xlu0 %v1239, 111
      %v1253 = vpop.permute.xlu0 %1252
      %1254 = vrot.lane.b32.xlu0 %v1240, 111
      %v1255 = vpop.permute.xlu0 %1254
      %1256 = vrot.lane.b32.xlu0 %v1241, 111
      %v1257 = vpop.permute.xlu0 %1256
      %1258 = vrot.lane.b32.xlu0 %v1242, 111
      %v1259 = vpop.permute.xlu0 %1258
      %1260 = vrot.lane.b32.xlu0 %v1243, 111
      %v1261 = vpop.permute.xlu0 %1260
      %v1262 = vsel %vm552, %v1251, %v1253
      %v1263 = vsel %vm552, %v1253, %v1255
      %v1264 = vsel %vm552, %v1257, %v1259
      %v1265 = vsel %vm552, %v1259, %v1261
      %v1270 = vsel %vm424, %v1262, 0.0
      %v1271 = vsel %vm425, %v1263, 0.0
      %v1272 = vsel %vm424, %v1264, 0.0
      %v1273 = vsel %vm425, %v1265, 0.0
      %1274 = vst [vmem:[#allocation7 + $0x100] sm:$0xff] %v1270
      %1275 = vst [vmem:[#allocation7 + $0x108] sm:$0xff] %v1271
      %1276 = vst [vmem:[#allocation7 + $0x110] sm:$0xff] %v1272
      %1277 = vst [vmem:[#allocation7 + $0x118] sm:$0xff] %v1273
      %v1278 = vld [vmem:[%s6] sm:$0xff]
      %v1279 = vld [vmem:[%s6 + $0x8] sm:$0xff]
      %v1280 = vld [vmem:[#allocation7] sm:$0xff]
      %v1281 = vld [vmem:[#allocation7 + $0x8] sm:$0xff]
      %v1282 = vld [vmem:[#allocation7 + $0x10] sm:$0xff]
      %v1283 = vld [vmem:[#allocation7 + $0x18] sm:$0xff]
      %v1284 = vld [vmem:[#allocation7 + $0x20] sm:$0xff]
      %v1285 = vld [vmem:[#allocation7 + $0x28] sm:$0xff]
      %v1286 = vld [vmem:[#allocation7 + $0x30] sm:$0xff]
      %v1287 = vld [vmem:[#allocation7 + $0x38] sm:$0xff]
      %v1288 = vld [vmem:[#allocation7 + $0x40] sm:$0xff]
      %v1289 = vld [vmem:[#allocation7 + $0x48] sm:$0xff]
      %v1290 = vld [vmem:[#allocation7 + $0x50] sm:$0xff]
      %v1291 = vld [vmem:[#allocation7 + $0x58] sm:$0xff]
      %v1292 = vld [vmem:[#allocation7 + $0x60] sm:$0xff]
      %v1293 = vld [vmem:[#allocation7 + $0x68] sm:$0xff]
      %v1294 = vld [vmem:[#allocation7 + $0x70] sm:$0xff]
      %v1295 = vld [vmem:[#allocation7 + $0x78] sm:$0xff]
      %v1296 = vld [vmem:[#allocation7 + $0x80] sm:$0xff]
      %v1297 = vld [vmem:[#allocation7 + $0x88] sm:$0xff]
      %v1298 = vld [vmem:[#allocation7 + $0x90] sm:$0xff]
      %v1299 = vld [vmem:[#allocation7 + $0x98] sm:$0xff]
      %v1300 = vld [vmem:[#allocation7 + $0xa0] sm:$0xff]
      %v1301 = vld [vmem:[#allocation7 + $0xa8] sm:$0xff]
      %v1302 = vld [vmem:[#allocation7 + $0xb0] sm:$0xff]
      %v1303 = vld [vmem:[#allocation7 + $0xb8] sm:$0xff]
      %v1304 = vld [vmem:[#allocation7 + $0xc0] sm:$0xff]
      %v1305 = vld [vmem:[#allocation7 + $0xc8] sm:$0xff]
      %v1306 = vld [vmem:[#allocation7 + $0xd0] sm:$0xff]
      %v1307 = vld [vmem:[#allocation7 + $0xd8] sm:$0xff]
      %v1308 = vld [vmem:[#allocation7 + $0xe0] sm:$0xff]
      %v1309 = vld [vmem:[#allocation7 + $0xe8] sm:$0xff]
      %v1310 = vld [vmem:[#allocation7 + $0xf0] sm:$0xff]
      %v1311 = vld [vmem:[#allocation7 + $0xf8] sm:$0xff]
      %v1312 = vld [vmem:[#allocation7 + $0x100] sm:$0xff]
      %v1313 = vld [vmem:[#allocation7 + $0x108] sm:$0xff]
      %v1314 = vld [vmem:[#allocation7 + $0x110] sm:$0xff]
      %v1315 = vld [vmem:[#allocation7 + $0x118] sm:$0xff]
      %v1316 = vld [vmem:[%s7] sm:$0xff]
      %1318 = vset.pattern.permute.xlu0 0
      %1319 = vperm.xlu0 %1318, %v1316
      %v1320 = vpop.permute.xlu0 %1319
      %v1323 = vsel %vm413, %v1279, 0
      %1325 = vmatprep.subr.mxu0 %v1281
      %1326 = vmatpush1.msra.mxu0 %v1280
      %1327 = vmatprep.subr.mxu0 %v1283
      %1328 = vmatpush1.msra.mxu0 %v1282
      %1329 = vmatprep.subr.mxu0 %v1285
      %1330 = vmatpush1.msra.mxu0 %v1284
      %1331 = vmatprep.subr.mxu0 %v1287
      %1332 = vmatpush1.msra.mxu0 %v1286
      %1333 = vmatprep.subr.mxu0 %v1289
      %1334 = vmatpush1.msra.mxu0 %v1288
      %1335 = vmatprep.subr.mxu0 %v1291
      %1336 = vmatpush1.msra.mxu0 %v1290
      %1337 = vmatprep.subr.mxu0 %v1293
      %1338 = vmatpush1.msra.mxu0 %v1292
      %1339 = vmatprep.subr.mxu0 %v1295
      %1340 = vmatpush1.msra.mxu0 %v1294
      %1341 = vmatprep.subr.mxu0 %v1297
      %1342 = vmatpush1.msra.mxu0 %v1296
      %1343 = vmatprep.subr.mxu0 %v1299
      %1344 = vmatpush1.msra.mxu0 %v1298
      %1345 = vmatprep.subr.mxu0 %v1301
      %1346 = vmatpush1.msra.mxu0 %v1300
      %1347 = vmatprep.subr.mxu0 %v1303
      %1348 = vmatpush1.msra.mxu0 %v1302
      %1349 = vmatprep.subr.mxu0 %v1305
      %1350 = vmatpush1.msra.mxu0 %v1304
      %1351 = vmatprep.subr.mxu0 %v1307
      %1352 = vmatpush1.msra.mxu0 %v1306
      %1353 = vmatprep.subr.mxu0 %v1309
      %1354 = vmatpush1.msra.mxu0 %v1308
      %1355 = vmatprep.subr.mxu0 %v1311
      %1356 = vmatpush1.msra.mxu0 %v1310
      %1357 = vmatprep.subr.mxu0 %v1313
      %1358 = vmatpush1.msra.mxu0 %v1312
      %1359 = vmatprep.subr.mxu0 %v1315
      %1360 = vmatpush1.msra.mxu0 %v1314
      %1361 = vmatprep.subr.mxu0 0.0
      %1362 = vmatpush1.msra.mxu0 0.0
      %1363 = vmatprep.subr.mxu0 0.0
      %1364 = vmatpush1.msra.mxu0 0.0
      %1365 = vmatprep.subr.mxu0 0.0
      %1366 = vmatpush1.msra.mxu0 0.0
      %1367 = vmatprep.subr.mxu0 0.0
      %1368 = vmatpush1.msra.mxu0 0.0
      %1369 = vmatprep.subr.mxu0 0.0
      %1370 = vmatpush1.msra.mxu0 0.0
      %1371 = vmatprep.subr.mxu0 0.0
      %1372 = vmatpush1.msra.mxu0 0.0
      %1373 = vmatprep.subr.mxu0 0.0
      %1374 = vmatpush1.msra.mxu0 0.0
      %1375 = vmatprep.subr.mxu0 0.0
      %1376 = vmatpush1.msra.mxu0 0.0
      %1377 = vmatprep.subr.mxu0 0.0
      %1378 = vmatpush1.msra.mxu0 0.0
      %1379 = vmatprep.subr.mxu0 0.0
      %1380 = vmatpush1.msra.mxu0 0.0
      %1381 = vmatprep.subr.mxu0 0.0
      %1382 = vmatpush1.msra.mxu0 0.0
      %1383 = vmatprep.subr.mxu0 0.0
      %1384 = vmatpush1.msra.mxu0 0.0
      %1385 = vmatprep.subr.mxu0 0.0
      %1386 = vmatpush1.msra.mxu0 0.0
      %1387 = vmatprep.subr.mxu0 0.0
      %1388 = vmatpush1.msra.mxu0 0.0
      %1389 = vmatprep.mubr.f32.mxu0 %v1323
      %1390 = vmatmul.mubr.f32.gmra.mrb[0].mxu0 %v1278
      %v1391 = vpop.f32.mrb[0].mxu0
      %v1392 = vadd.f32 %v1320, %v1391
      %v1393 = vpop.f32.mrb[0].mxu0
      %v1394 = vadd.f32 %v1320, %v1393
      %1395 = vdwg.mxu0
      %s1396 = sld [smem:[#allocation10]]
      %vm1397 = vcmp.ge.f32.partialorder %v1392, 0.0
      %vm1398 = vcmp.ge.f32.partialorder %v1394, 0.0
      %v1399 = vstv %s1396
      %v1400 = vmul.f32 %v1399, %v1392
      %v1401 = vmul.f32 %v1399, %v1394
      %v1402 = vsel %vm1397, %v1392, %v1400
      %v1403 = vsel %vm1398, %v1394, %v1401
      %1404 = vst [vmem:[%s335] sm:$0xff] %v1402
      %1405 = vst [vmem:[%s335 + $0x8] sm:$0xff] %v1403
      %p1406 = scmp.lt.s32.totalorder %s23, 1
      %s1407 = scalar_select %p1406, %s23, 1
      %s1408 = smul.addr %s1407, 2
      %s1409 = smul.addr %s1408, 8
      %s1410 = scalar_lea.vmem %s9, %s1409
      // Predicated region
      $region57: #{begin_block_forward.1} parent=55 // pred_check
        %p1411 = pneg %p235
      $region58: #{begin_block_forward.1} parent=55 // pred_check_branch
        %1413 = sbr.rel (%p1411) target = $region60
      $region59: #{begin_block_forward.1} parent=55 // pred_region
        _
      $region60: #{begin_block_forward.1} parent=55 // pred_fallthru
        _
    $region56: #{begin_block_forward.1} parent=5 // pred_fallthru
      _
    %p1414 = scmp.le.s32.totalorder 2, %s18
    // Predicated region
    $region61: #{begin_block_forward.1} parent=5 // pred_check
      %p1415 = pneg %p1414
    $region62: #{begin_block_forward.1} parent=5 // pred_check_branch
      %1417 = sbr.rel (%p1415) target = $region64
    $region63: #{begin_block_forward.1} parent=5 // pred_region
      %s1418 = ssub.s32 %s18, 2
      // Predicated region
      $region65: #{begin_block_forward.1} parent=63 // pred_check
        %p1419 = pneg %p241
      $region66: #{begin_block_forward.1} parent=63 // pred_check_branch
        %1421 = sbr.rel (%p1419) target = $region68
      $region67: #{begin_block_forward.1} parent=63 // pred_region
        %p1422 = scmp.lt.s32.totalorder %s24, 1
        %s1423 = scalar_select %p1422, %s24, 1
        %s1424 = smul.addr %s1423, 2
        %s1425 = smul.addr %s1424, 8
        %s1426 = scalar_lea.vmem %s9, %s1425
      $region68: #{begin_block_forward.1} parent=63 // pred_fallthru
        _
    $region64: #{begin_block_forward.1} parent=5 // pred_fallthru
      _
  $region6: #{begin_block_forward.1} parent=0 // loop_footer
    %s22 = sadd.s32 1, %s18
  $region7: #{begin_block_forward.1} parent=0 // loop_footer_branch
    %17 = sbr.rel target = $region3
  $region8: #{begin_block_forward.1} parent=0 // loop_exit
    _

</llo_original>
